<compile_context>
chip_gen: v7x
topology: tpu7x:2x2x1
jax: 0.10.0
libtpu: 0.0.40
codegen_flags: <defaults>
</compile_context>

<pallas_src>
import numpy as np
import jax
import jax.numpy as jnp
from jax import lax
from jax.experimental import pallas as pl
from jax.experimental.pallas import tpu as pltpu


# --------------------------------------------------------------------------
# 1-D bilinear interpolation matrix (PyTorch align_corners=False, upsampling).
# Rows sum to exactly 1 (needed for the conv-bias folding).
# --------------------------------------------------------------------------
def bilinear_matrix(out_size, in_size):
    # This matches F.interpolate(..., mode='bilinear', align_corners=False)
    # for UPSAMPLING only (negative src clamped to 0, no antialias).
    assert out_size >= in_size, "only upsampling is supported here"
    M = np.zeros((out_size, in_size), dtype=np.float32)
    scale = in_size / out_size
    for i in range(out_size):
        src = (i + 0.5) * scale - 0.5
        src = max(src, 0.0)
        x0 = min(int(np.floor(src)), in_size - 1)
        x1 = min(x0 + 1, in_size - 1)
        lam = src - x0
        M[i, x0] += 1.0 - lam
        M[i, x1] += lam
    return M


# --------------------------------------------------------------------------
# Kernel A: mid-res head.  One P-row tile per program.
#   slab_ref: (1, Tp*C, Wsum) bf16   rows = (p_local, c), cols = concatenated
#                                    low-res width of all groups (height
#                                    upsample + conv1 already applied).
#   rct_ref : (Wsum, P)       bf16   concatenated width-interp matrices^T.
#   w2_ref  : (1, C, P)       f32    conv2 weight, lane-dense broadcast.
#   b2_ref  : (1, P)          f32    conv2 bias, lane-dense broadcast.
#   z_ref   : (1, Tp, P)      f32    output row-tile of the mid-res map.
# --------------------------------------------------------------------------
def _midres_kernel(slab_ref, rct_ref, w2_ref, b2_ref, z_ref):
    tp_c = slab_ref.shape[1]
    C = w2_ref.shape[1]
    P = rct_ref.shape[1]
    Tp = tp_c // C

    # Width upsample for all (p, c) rows of this tile: ONE MXU matmul;
    # the cross-group sum is fused into the contraction (K = sum of w_g).
    y = jnp.dot(slab_ref[0], rct_ref[...],
                preferred_element_type=jnp.float32)            # (Tp*C, P) f32
    # conv1 bias already folded into the slab; ReLU.
    y = jnp.maximum(y, 0.0)
    # conv2 (1x1, C -> 1): per-channel weighted sublane reduction on the VPU
    # (free filler under MXU slack per the perf review).
    y3 = y.reshape(Tp, C, P)
    z = jnp.sum(y3 * w2_ref[...], axis=1) + b2_ref[...]        # (Tp, P) f32
    z_ref[0] = z


# --------------------------------------------------------------------------
# Kernel B: final bilinear upsample (P,P) -> (S,S), one S-row tile per program.
#   f32 operands/accumulation (accuracy of the last stage).
# --------------------------------------------------------------------------
def _final_upsample_kernel(z_ref, rrf_ref, rcf_ref, out_ref):
    a = jnp.dot(rrf_ref[...], z_ref[0],
                preferred_element_type=jnp.float32)            # (Ts, P)
    out_ref[0] = jnp.dot(a, rcf_ref[...],
                         preferred_element_type=jnp.float32)   # (Ts, S)


# --------------------------------------------------------------------------
# Kernel C: latent head.  fc1 -> relu -> fc2 -> L2-normalize (dim=1).
# Weights untransposed; dot_general contracts their input dim directly.
# --------------------------------------------------------------------------
def latent_kernel(code_ref, w1_ref, b1_ref, w2_ref, b2_ref, out_ref):
    h = lax.dot_general(code_ref[...], w1_ref[...],
                        dimension_numbers=(((1,), (1,)), ((), ())),
                        preferred_element_type=jnp.float32) + b1_ref[...]
    h = jnp.maximum(h, 0.0)
    h = lax.dot_general(h, w2_ref[...],
                        dimension_numbers=(((1,), (1,)), ((), ())),
                        preferred_element_type=jnp.float32) + b2_ref[...]
    ss = jnp.sum(h * h, axis=1, keepdims=True)
    # F.normalize(p=2, dim=1): x / max(||x||, 1e-12)
    out_ref[...] = h * lax.rsqrt(jnp.maximum(ss, 1e-24))


# --------------------------------------------------------------------------
# Wrapper
# --------------------------------------------------------------------------
def image_encoder_forward(feat_code, feat_maps, params, *, img_res, res_inter,
                          tile_p=32, tile_s=128):
    """feat_code: (B, 512) f32; feat_maps: list of (B, C_i, h_i, w_i) f32
       (outputs of the external ResNet18 backbone)."""
    B = feat_code.shape[0]
    P, S = res_inter, img_res
    W1 = params["conv1_w"]                                  # (Cm, sum C_i)
    Cm = W1.shape[0]

    # ---- XLA prologue: conv1 mixing at LOW res, bias fold, height upsample ----
    mixed = {}
    off = 0
    for fm in feat_maps:
        C_i = fm.shape[1]
        m = jnp.einsum('oc,bcij->boij', W1[:, off:off + C_i],
                       fm.astype(jnp.float32))
        off += C_i
        key = (int(fm.shape[2]), int(fm.shape[3]))
        mixed[key] = m if key not in mixed else mixed[key] + m
    groups = list(mixed.items())
    # Fold conv1 bias into exactly one group (bilinear rows sum to 1).
    b1 = params["conv1_b"].astype(jnp.float32)
    (hw0, m0) = groups[0]
    groups[0] = (hw0, m0 + b1[None, :, None, None])

    # Height upsample (i -> p) at low width; layout (B, P, C, w) so the heavy
    # in-kernel matmul has rows (p, c) and contracts the lane dim; concat the
    # groups along the low-res width axis to fuse the cross-group sum.
    slabs, rct_rows = [], []
    for (h, w), m in groups:
        rr = jnp.asarray(bilinear_matrix(P, h), jnp.float32)        # (P, h)
        slabs.append(jnp.einsum('pi,bcij->bpcj', rr, m))            # (B,P,C,w) f32
        rct_rows.append(bilinear_matrix(P, w).T)                    # (w, P)
    Wsum = int(sum(s.shape[-1] for s in slabs))
    slab = jnp.concatenate(slabs, axis=3).reshape(B, P * Cm, Wsum)
    slab = slab.astype(jnp.bfloat16)
    rct_cat = jnp.asarray(np.concatenate(rct_rows, axis=0), jnp.bfloat16)  # (Wsum,P)

    w2b = jnp.broadcast_to(
        params["conv2_w"].astype(jnp.float32).reshape(1, Cm, 1), (1, Cm, P))
    b2b = jnp.broadcast_to(
        params["conv2_b"].astype(jnp.float32).reshape(1, 1), (1, P))

    # ---- Pallas kernel A: width upsample + ReLU + conv2 -> mid-res map z ----
    tp = min(tile_p, P)
    assert P % tp == 0 and (tp * Cm) % 8 == 0
    z = pl.pallas_call(
        _midres_kernel,
        out_shape=jax.ShapeDtypeStruct((B, P, P), jnp.float32),
        grid=(B, P // tp),
        in_specs=[
            pl.BlockSpec((1, tp * Cm, Wsum), lambda b, t: (b, t, 0)),
            pl.BlockSpec((Wsum, P), lambda b, t: (0, 0)),
            pl.BlockSpec((1, Cm, P), lambda b, t: (0, 0, 0)),
            pl.BlockSpec((1, P), lambda b, t: (0, 0)),
        ],
        out_specs=pl.BlockSpec((1, tp, P), lambda b, t: (b, t, 0)),
        compiler_params=pltpu.CompilerParams(
            dimension_semantics=("parallel", "parallel"),
            vmem_limit_bytes=16 * 1024 * 1024),
    )(slab, rct_cat, w2b, b2b)

    # ---- Pallas kernel B: final bilinear upsample to (S, S) ----
    ts = min(tile_s, S)
    assert S % ts == 0 and ts % 8 == 0
    rrf = jnp.asarray(bilinear_matrix(S, P), jnp.float32)           # (S, P)
    rcfT = jnp.asarray(bilinear_matrix(S, P).T, jnp.float32)        # (P, S)
    featmap = pl.pallas_call(
        _final_upsample_kernel,
        out_shape=jax.ShapeDtypeStruct((B, S, S), jnp.float32),
        grid=(B, S // ts),
        in_specs=[
            pl.BlockSpec((1, P, P), lambda b, t: (b, 0, 0)),
            pl.BlockSpec((ts, P), lambda b, t: (t, 0)),
            pl.BlockSpec((P, S), lambda b, t: (0, 0)),
        ],
        out_specs=pl.BlockSpec((1, ts, S), lambda b, t: (b, t, 0)),
        compiler_params=pltpu.CompilerParams(
            dimension_semantics=("parallel", "parallel"),
            vmem_limit_bytes=8 * 1024 * 1024),
    )(z, rrf, rcfT)

    # (B, S*S, 1) view only at the API boundary; kernel stores stay lane-dense.
    feature_map = featmap.reshape(B, S * S, 1)   # == view(B,1,-1).permute(0,2,1)

    # ---- latent head (tiny; single Pallas call, f32 throughout) ----
    L = params["fc1_w"].shape[0]
    latent = pl.pallas_call(
        latent_kernel,
        out_shape=jax.ShapeDtypeStruct((B, L), jnp.float32),
        grid=(1,),
        in_specs=[pl.BlockSpec((B, 512), lambda i: (0, 0)),
                  pl.BlockSpec((L, 512), lambda i: (0, 0)),
                  pl.BlockSpec((1, L), lambda i: (0, 0)),
                  pl.BlockSpec((L, L), lambda i: (0, 0)),
                  pl.BlockSpec((1, L), lambda i: (0, 0))],
        out_specs=pl.BlockSpec((B, L), lambda i: (0, 0)),
    )(feat_code, params["fc1_w"], params["fc1_b"].reshape(1, L),
      params["fc2_w"], params["fc2_b"].reshape(1, L))

    return feature_map, latent


# --------------------------------------------------------------------------
# Deterministic parameter init (xavier-uniform-like, zero biases).
# --------------------------------------------------------------------------
def init_params(key, latent_dim):
    def xavier(k, shape):
        bound = np.sqrt(6.0 / (shape[0] + shape[1]))
        return jax.random.uniform(k, shape, jnp.float32, -bound, bound)
    ks = jax.random.split(key, 4)
    return {
        "fc1_w": xavier(ks[0], (latent_dim, 512)),
        "fc1_b": jnp.zeros((latent_dim,), jnp.float32),
        "fc2_w": xavier(ks[1], (latent_dim, latent_dim)),
        "fc2_b": jnp.zeros((latent_dim,), jnp.float32),
        "conv1_w": xavier(ks[2], (128, 256)),             # 1x1 conv, 64+64+128 -> 128
        "conv1_b": jnp.zeros((128,), jnp.float32),
        "conv2_w": xavier(ks[3], (1, 128)),               # 1x1 conv, 128 -> 1
        "conv2_b": jnp.zeros((1,), jnp.float32),
    }


if __name__ == "__main__":
    # Small shapes consistent with the module's ratios:
    #   real: img_res=256, intermediate res=128, maps at 32/32/16 (ch 64/64/128)
    #   here: img_res=32,  intermediate res=16,  maps at  4/ 4/ 2 (ch 64/64/128)
    B, img_res, res_inter, latent_dim = 2, 32, 16, 32

    key = jax.random.PRNGKey(0)
    k_code, k_m1, k_m2, k_m3, k_params = jax.random.split(key, 5)

    feat_code = jax.random.normal(k_code, (B, 512), jnp.float32)
    feat_maps = [
        jax.random.normal(k_m1, (B, 64, 4, 4), jnp.float32),
        jax.random.normal(k_m2, (B, 64, 4, 4), jnp.float32),
        jax.random.normal(k_m3, (B, 128, 2, 2), jnp.float32),
    ]
    params = init_params(k_params, latent_dim)

    # tile_p / tile_s chosen to exercise multi-tile grids at the test shapes
    # (production defaults: tile_p=32, tile_s=128).
    feature_map, latent = image_encoder_forward(
        feat_code, feat_maps, params, img_res=img_res, res_inter=res_inter,
        tile_p=8, tile_s=16)
    jax.block_until_ready((feature_map, latent))

    assert feature_map.shape == (B, img_res * img_res, 1)
    assert latent.shape == (B, latent_dim)

    # ---- NumPy (f64) reference of the PyTorch head ----
    def np_up(x, oh, ow):
        Rr = bilinear_matrix(oh, x.shape[2]).astype(np.float64)
        Rc = bilinear_matrix(ow, x.shape[3]).astype(np.float64)
        t = np.einsum('qw,bchw->bchq', Rc, x)
        return np.einsum('ph,bchq->bcpq', Rr, t)

    fms = [np.asarray(f, np.float64) for f in feat_maps]
    pr = {k: np.asarray(v, np.float64) for k, v in params.items()}
    U = np.concatenate([np_up(f, res_inter, res_inter) for f in fms], axis=1)
    yy = np.einsum('oc,bcpq->bopq', pr["conv1_w"], U) + pr["conv1_b"][None, :, None, None]
    yy = np.maximum(yy, 0.0)
    zz = np.einsum('oc,bcpq->bopq', pr["conv2_w"], yy) + pr["conv2_b"][None, :, None, None]
    fm_ref = np_up(zz, img_res, img_res).reshape(B, 1, -1).transpose(0, 2, 1)

    code = np.asarray(feat_code, np.float64)
    lat = np.maximum(code @ pr["fc1_w"].T + pr["fc1_b"], 0.0)
    lat = lat @ pr["fc2_w"].T + pr["fc2_b"]
    lat_ref = lat / np.maximum(np.linalg.norm(lat, axis=1, keepdims=True), 1e-12)

    # bf16 slab / bf16 width-interp matrices, f32 accumulation and f32 final
    # upsample -> moderate tolerance for the feature map.
    np.testing.assert_allclose(np.asarray(feature_map, np.float64), fm_ref,
                               rtol=5e-2, atol=5e-2)
    np.testing.assert_allclose(np.asarray(latent, np.float64), lat_ref,
                               rtol=2e-3, atol=2e-3)
    np.testing.assert_allclose(np.linalg.norm(np.asarray(latent), axis=1),
                               np.ones(B), rtol=1e-3)

    print("KERNEL_OK")
</pallas_src>

<mosaic_0001>
module attributes {stable_mosaic.version = 11 : i64} {
  func.func @_midres_kernel(%arg0: i32, %arg1: i32, %arg2: memref<1x1024x6xbf16, #tpu.memory_space<vmem>>, %arg3: memref<6x16xbf16, #tpu.memory_space<vmem>>, %arg4: memref<1x128x16xf32, #tpu.memory_space<vmem>>, %arg5: memref<1x16xf32, #tpu.memory_space<vmem>>, %arg6: memref<1x8x16xf32, #tpu.memory_space<vmem>>) attributes {dimension_semantics = [#tpu.dimension_semantics<parallel>, #tpu.dimension_semantics<parallel>], iteration_bounds = array<i64: 2, 2>, scalar_prefetch = 0 : i64, scratch_operands = 0 : i64, tpu.core_type = #tpu.core_type<tc>, window_params = [{transform_indices = @transform_0, window_bounds = array<i64: 1, 1024, 6>}, {pipeline_mode = #tpu.pipeline_mode<synchronous>, transform_indices = @transform_1, window_bounds = array<i64: 6, 16>}, {pipeline_mode = #tpu.pipeline_mode<synchronous>, transform_indices = @transform_2, window_bounds = array<i64: 1, 128, 16>}, {pipeline_mode = #tpu.pipeline_mode<synchronous>, transform_indices = @transform_3, window_bounds = array<i64: 1, 16>}, {transform_indices = @transform_4, window_bounds = array<i64: 1, 8, 16>}]} {
    %c0 = arith.constant 0 : index
    %c0_0 = arith.constant 0 : index
    %c0_1 = arith.constant 0 : index
    %0 = vector.load %arg2[%c0, %c0_0, %c0_1] : memref<1x1024x6xbf16, #tpu.memory_space<vmem>>, vector<1x1024x6xbf16>
    %1 = vector.shape_cast %0 : vector<1x1024x6xbf16> to vector<1024x6xbf16>
    %c0_2 = arith.constant 0 : index
    %c0_3 = arith.constant 0 : index
    %2 = vector.load %arg3[%c0_2, %c0_3] : memref<6x16xbf16, #tpu.memory_space<vmem>>, vector<6x16xbf16>
    %cst = arith.constant dense<0.000000e+00> : vector<1024x16xf32>
    %3 = tpu.matmul %1, %2, %cst {dimension_numbers = #tpu.dot_dimension_numbers<[1], [0], [0], [1], [0, 0, 1, 1], [], []>} : vector<1024x6xbf16>, vector<6x16xbf16>, vector<1024x16xf32> -> vector<1024x16xf32>
    %cst_4 = arith.constant 0.000000e+00 : f32
    %4 = vector.broadcast %cst_4 : f32 to vector<1024x16xf32>
    %5 = arith.maximumf %3, %4 : vector<1024x16xf32>
    %6 = vector.shape_cast %5 : vector<1024x16xf32> to vector<8x128x16xf32>
    %c0_5 = arith.constant 0 : index
    %c0_6 = arith.constant 0 : index
    %c0_7 = arith.constant 0 : index
    %7 = vector.load %arg4[%c0_5, %c0_6, %c0_7] : memref<1x128x16xf32, #tpu.memory_space<vmem>>, vector<1x128x16xf32>
    %8 = vector.broadcast %7 : vector<1x128x16xf32> to vector<8x128x16xf32>
    %9 = arith.mulf %6, %8 : vector<8x128x16xf32>
    %cst_8 = arith.constant dense<0.000000e+00> : vector<8x16xf32>
    %10 = vector.multi_reduction <add>, %9, %cst_8 [1] : vector<8x128x16xf32> to vector<8x16xf32>
    %c0_9 = arith.constant 0 : index
    %c0_10 = arith.constant 0 : index
    %11 = vector.load %arg5[%c0_9, %c0_10] : memref<1x16xf32, #tpu.memory_space<vmem>>, vector<1x16xf32>
    %12 = vector.broadcast %11 : vector<1x16xf32> to vector<8x16xf32>
    %13 = arith.addf %10, %12 : vector<8x16xf32>
    %c0_11 = arith.constant 0 : index
    %c0_12 = arith.constant 0 : index
    %c0_13 = arith.constant 0 : index
    %14 = vector.load %arg6[%c0_11, %c0_12, %c0_13] : memref<1x8x16xf32, #tpu.memory_space<vmem>>, vector<1x8x16xf32>
    %15 = vector.shape_cast %14 : vector<1x8x16xf32> to vector<8x16xf32>
    %16 = vector.shape_cast %13 : vector<8x16xf32> to vector<1x8x16xf32>
    tpu.vector_store %arg6[%c0_11, %c0_12, %c0_13], %16 {strides = array<i32>} : memref<1x8x16xf32, #tpu.memory_space<vmem>>, vector<1x8x16xf32>,
    return
  }
  func.func @transform_0(%arg0: i32, %arg1: i32) -> (i32, i32, i32) {
    %c0_i32 = arith.constant 0 : i32
    %c0_i32_0 = arith.constant 0 : i32
    return %arg0, %arg1, %c0_i32 : i32, i32, i32
  }
  func.func @transform_1(%arg0: i32, %arg1: i32) -> (i32, i32) {
    %c0_i32 = arith.constant 0 : i32
    %c0_i32_0 = arith.constant 0 : i32
    %c0_i32_1 = arith.constant 0 : i32
    return %c0_i32, %c0_i32_0 : i32, i32
  }
  func.func @transform_2(%arg0: i32, %arg1: i32) -> (i32, i32, i32) {
    %c0_i32 = arith.constant 0 : i32
    %c0_i32_0 = arith.constant 0 : i32
    %c0_i32_1 = arith.constant 0 : i32
    %c0_i32_2 = arith.constant 0 : i32
    return %c0_i32, %c0_i32_0, %c0_i32_1 : i32, i32, i32
  }
  func.func @transform_3(%arg0: i32, %arg1: i32) -> (i32, i32) {
    %c0_i32 = arith.constant 0 : i32
    %c0_i32_0 = arith.constant 0 : i32
    %c0_i32_1 = arith.constant 0 : i32
    return %c0_i32, %c0_i32_0 : i32, i32
  }
  func.func @transform_4(%arg0: i32, %arg1: i32) -> (i32, i32, i32) {
    %c0_i32 = arith.constant 0 : i32
    %c0_i32_0 = arith.constant 0 : i32
    return %arg0, %arg1, %c0_i32 : i32, i32, i32
  }
}

</mosaic_0001>

<llo_original>
// kernel: tpu_custom_call.1
$region0: #{tpu_custom_call.1}
  #allocation0 [shape = 'u32[]', space=smem, size = 0x4, offset = 0x4, fixed_abs, tag = 'smem constant byte address 0x4 - core index']
  #allocation1 [shape = 'u32[144,128]{1,0:T(1,128)}', space=vmem, size = 0x12000, scoped, tag = 'internal scratch']
  %s0 = inlined_call_operand.vmem [shape: bf16[2,2048,6], index: 0, kind: input, shape index: {}]
  %s1 = inlined_call_operand.vmem [shape: bf16[6,16], index: 1, kind: input, shape index: {}]
  %s2 = inlined_call_operand.vmem [shape: f32[1,128,16], index: 2, kind: input, shape index: {}]
  %s3 = inlined_call_operand.vmem [shape: f32[1,16], index: 3, kind: input, shape index: {}]
  %s4 = inlined_call_operand.hbm [shape: f32[2,16,16], index: 4, kind: output, shape index: {}]
  %s5 = sld [smem:[#allocation0]]
  $region49: #{tpu_custom_call.1} parent=0
    _
  %s7 = ssub.s32 1, %s5
  %s8 = scalar_select 0, %s7, %s5
  $region1: #{tpu_custom_call.1} parent=0
    #allocation2 [shape = 'u8[8192]{0}', space=vmem, size = 0x2000, scoped, tag = 'output window, operand 0']
    #allocation3 [shape = 's32[2]{0}', space=sflag, size = 0x8, scoped, tag = 'scoped memory for tpu_custom_call.1']
    %9 = vsyncpa [#allocation3], 0
    %s10 = scalar_lea.sflag [#allocation3], 1
    %11 = vsyncpa %s10, 0
    loop: start=0, step=1, limit=6
    $region2: #{tpu_custom_call.1} parent=1 // loop_pre_header
      _
    $region3: #{tpu_custom_call.1} parent=1 // loop_header
      %s13 = sphi 0, %s17
      %p14 = scmp.ge.s32.totalorder %s13, 6
      %s20 = sphi 0, %s32
      %s21 = sphi 0, %s28
      %s22 = sphi 0, %s20
      %s23 = sphi 0, %s21
      %s24 = sphi 0, %s22
      %s25 = sphi 0, %s23
      %s37 = sphi 0, %s39
      %s40 = sphi 0, %s37
      %s41 = sphi 0, %s40
      %s57 = sphi 0, %s41
      %s61 = sphi 0, %s61
      %s63 = sphi 0, %s61
      %s64 = sphi 0, %s63
      %s78 = sphi 0, %s64
      %s82 = sphi 0, %s82
      %s84 = sphi 0, %s82
      %s85 = sphi 0, %s84
      %s99 = sphi 0, %s85
      %s103 = sphi 0, %s103
      %s105 = sphi 0, %s103
      %s106 = sphi 0, %s105
      %s120 = sphi 0, %s106
      %s128 = sphi 0, %s130
      %s131 = sphi 0, %s128
      %s132 = sphi 0, %s131
      %s148 = sphi 0, %s132
    $region4: #{tpu_custom_call.1} parent=1 // loop_header_branch
      %16 = sbr.rel (%p14) target = $region8
    $region5: #{tpu_custom_call.1} parent=1 // loop_body
      %s18 = ssub.s32 %s13, 1
      %s19 = ssub.s32 %s13, 2
      %s26 = sadd.s32 1, %s21
      %p27 = scmp.ge.s32.totalorder %s26, 2
      %s28 = scalar_select %p27, 0, %s26
      %s29 = sadd.s32 1, %s20
      %s30 = scalar_select %p27, %s29, %s20
      %p31 = scmp.ge.s32.totalorder %s30, 2
      %s32 = scalar_select %p31, 0, %s30
      %s33 = ssub.s32 %s20, %s32
      %s34 = ssub.s32 %s21, %s28
      %s35 = sor.u32 %s33, %s34
      %p36 = scmp.eq.s32.totalorder %s35, 0
      %s38 = sadd.s32 %s37, 1
      %s39 = scalar_select %p36, %s37, %s38
      %p42 = pneg %p36
      %p43 = scmp.eq.s32.totalorder %s13, 3
      %p44 = por %p42, %p43
      %p45 = scmp.ne.s32.totalorder %s37, %s40
      %p46 = scmp.eq.s32.totalorder %s13, 0
      %p47 = por %p45, %p46
      %p48 = scmp.ne.s32.totalorder %s37, %s40
      %p49 = scmp.eq.s32.totalorder %s18, 3
      %p50 = por %p48, %p49
      %p51 = scmp.ne.s32.totalorder %s40, %s41
      %p52 = scmp.eq.s32.totalorder %s18, 0
      %p53 = por %p51, %p52
      %p54 = scmp.ne.s32.totalorder %s40, %s41
      %p55 = scmp.eq.s32.totalorder %s19, 3
      %p56 = por %p54, %p55
      %p58 = scmp.ne.s32.totalorder %s41, %s57
      %p59 = scmp.eq.s32.totalorder %s19, 0
      %p60 = por %p58, %p59
      %s62 = sadd.s32 %s61, 1
      %p65 = scmp.eq.s32.totalorder %s13, 3
      %p66 = scmp.ne.s32.totalorder %s61, %s63
      %p67 = scmp.eq.s32.totalorder %s13, 0
      %p68 = por %p66, %p67
      %p69 = scmp.ne.s32.totalorder %s61, %s63
      %p70 = scmp.eq.s32.totalorder %s18, 3
      %p71 = por %p69, %p70
      %p72 = scmp.ne.s32.totalorder %s63, %s64
      %p73 = scmp.eq.s32.totalorder %s18, 0
      %p74 = por %p72, %p73
      %p75 = scmp.ne.s32.totalorder %s63, %s64
      %p76 = scmp.eq.s32.totalorder %s19, 3
      %p77 = por %p75, %p76
      %p79 = scmp.ne.s32.totalorder %s64, %s78
      %p80 = scmp.eq.s32.totalorder %s19, 0
      %p81 = por %p79, %p80
      %s83 = sadd.s32 %s82, 1
      %p86 = scmp.eq.s32.totalorder %s13, 3
      %p87 = scmp.ne.s32.totalorder %s82, %s84
      %p88 = scmp.eq.s32.totalorder %s13, 0
      %p89 = por %p87, %p88
      %p90 = scmp.ne.s32.totalorder %s82, %s84
      %p91 = scmp.eq.s32.totalorder %s18, 3
      %p92 = por %p90, %p91
      %p93 = scmp.ne.s32.totalorder %s84, %s85
      %p94 = scmp.eq.s32.totalorder %s18, 0
      %p95 = por %p93, %p94
      %p96 = scmp.ne.s32.totalorder %s84, %s85
      %p97 = scmp.eq.s32.totalorder %s19, 3
      %p98 = por %p96, %p97
      %p100 = scmp.ne.s32.totalorder %s85, %s99
      %p101 = scmp.eq.s32.totalorder %s19, 0
      %p102 = por %p100, %p101
      %s104 = sadd.s32 %s103, 1
      %p107 = scmp.eq.s32.totalorder %s13, 3
      %p108 = scmp.ne.s32.totalorder %s103, %s105
      %p109 = scmp.eq.s32.totalorder %s13, 0
      %p110 = por %p108, %p109
      %p111 = scmp.ne.s32.totalorder %s103, %s105
      %p112 = scmp.eq.s32.totalorder %s18, 3
      %p113 = por %p111, %p112
      %p114 = scmp.ne.s32.totalorder %s105, %s106
      %p115 = scmp.eq.s32.totalorder %s18, 0
      %p116 = por %p114, %p115
      %p117 = scmp.ne.s32.totalorder %s105, %s106
      %p118 = scmp.eq.s32.totalorder %s19, 3
      %p119 = por %p117, %p118
      %p121 = scmp.ne.s32.totalorder %s106, %s120
      %p122 = scmp.eq.s32.totalorder %s19, 0
      %p123 = por %p121, %p122
      %s124 = ssub.s32 %s20, %s32
      %s125 = ssub.s32 %s21, %s28
      %s126 = sor.u32 %s124, %s125
      %p127 = scmp.eq.s32.totalorder %s126, 0
      %s129 = sadd.s32 %s128, 1
      %s130 = scalar_select %p127, %s128, %s129
      %p133 = pneg %p127
      %p134 = scmp.eq.s32.totalorder %s13, 3
      %p135 = por %p133, %p134
      %p136 = scmp.ne.s32.totalorder %s128, %s131
      %p137 = scmp.eq.s32.totalorder %s13, 0
      %p138 = por %p136, %p137
      %p139 = scmp.ne.s32.totalorder %s128, %s131
      %p140 = scmp.eq.s32.totalorder %s18, 3
      %p141 = por %p139, %p140
      %p142 = scmp.ne.s32.totalorder %s131, %s132
      %p143 = scmp.eq.s32.totalorder %s18, 0
      %p144 = por %p142, %p143
      %p145 = scmp.ne.s32.totalorder %s131, %s132
      %p146 = scmp.eq.s32.totalorder %s19, 3
      %p147 = por %p145, %p146
      %p149 = scmp.ne.s32.totalorder %s132, %s148
      %p150 = scmp.eq.s32.totalorder %s19, 0
      %p151 = por %p149, %p150
      %p152 = scmp.le.s32.totalorder 1, %s13
      %p153 = scmp.lt.s32.totalorder %s13, 5
      %p154 = pnand %p152, %p153
      %p155 = pneg %p154
      // Predicated region
      $region9: #{tpu_custom_call.1} parent=5 // pred_check
        _
      $region10: #{tpu_custom_call.1} parent=5 // pred_check_branch
        %157 = sbr.rel (%p154) target = $region12
      $region11: #{tpu_custom_call.1} parent=5 // pred_region
        %s158 = ssub.s32 %s13, 1
        // Predicated region
        $region13: #{tpu_custom_call.1} parent=11 // pred_check
          %p159 = pneg %p74
        $region14: #{tpu_custom_call.1} parent=11 // pred_check_branch
          %161 = sbr.rel (%p159) target = $region16
        $region15: #{tpu_custom_call.1} parent=11 // pred_region
          _
        $region16: #{tpu_custom_call.1} parent=11 // pred_fallthru
          _
        // Predicated region
        $region17: #{tpu_custom_call.1} parent=11 // pred_check
          %p162 = pneg %p95
        $region18: #{tpu_custom_call.1} parent=11 // pred_check_branch
          %164 = sbr.rel (%p162) target = $region20
        $region19: #{tpu_custom_call.1} parent=11 // pred_region
          _
        $region20: #{tpu_custom_call.1} parent=11 // pred_fallthru
          _
        // Predicated region
        $region21: #{tpu_custom_call.1} parent=11 // pred_check
          %p165 = pneg %p116
        $region22: #{tpu_custom_call.1} parent=11 // pred_check_branch
          %167 = sbr.rel (%p165) target = $region24
        $region23: #{tpu_custom_call.1} parent=11 // pred_region
          _
        $region24: #{tpu_custom_call.1} parent=11 // pred_fallthru
          _
      $region12: #{tpu_custom_call.1} parent=5 // pred_fallthru
        _
      %p168 = scmp.lt.s32.totalorder %s13, 4
      // Predicated region
      $region25: #{tpu_custom_call.1} parent=5 // pred_check
        %p169 = pneg %p168
      $region26: #{tpu_custom_call.1} parent=5 // pred_check_branch
        %171 = sbr.rel (%p169) target = $region28
      $region27: #{tpu_custom_call.1} parent=5 // pred_region
        // Predicated region
        $region29: #{tpu_custom_call.1} parent=27 // pred_check
          %p172 = pneg %p47
        $region30: #{tpu_custom_call.1} parent=27 // pred_check_branch
          %174 = sbr.rel (%p172) target = $region32
        $region31: #{tpu_custom_call.1} parent=27 // pred_region
          %s175 = smul.u32 128, %s21
          %p176 = scmp.lt.s32.totalorder %s20, 1
          %s177 = scalar_select %p176, %s20, 1
          %p178 = scmp.lt.s32.totalorder %s175, 255
          %s179 = scalar_select %p178, %s175, 255
          %s180 = smul.addr %s177, 256
          %s181 = sadd.s32 %s179, %s180
          %s182 = smul.addr %s181, 4
          %s183 = scalar_lea.vmem %s0, %s182
          %s184 = smul.u32 128, %s21
        $region32: #{tpu_custom_call.1} parent=27 // pred_fallthru
          _
      $region28: #{tpu_custom_call.1} parent=5 // pred_fallthru
        _
      %p185 = scmp.le.s32.totalorder 1, %s13
      %p186 = scmp.lt.s32.totalorder %s13, 5
      %p187 = pnand %p185, %p186
      %p188 = pneg %p187
      // Predicated region
      $region33: #{tpu_custom_call.1} parent=5 // pred_check
        _
      $region34: #{tpu_custom_call.1} parent=5 // pred_check_branch
        %190 = sbr.rel (%p187) target = $region36
      $region35: #{tpu_custom_call.1} parent=5 // pred_region
        %s191 = ssub.s32 %s13, 1
        %s192 = smul.u32 128, %s23
        %p193 = scmp.lt.s32.totalorder %s22, 1
        %s194 = scalar_select %p193, %s22, 1
        %p195 = scmp.lt.s32.totalorder %s192, 255
        %s196 = scalar_select %p195, %s192, 255
        %s197 = smul.addr %s194, 256
        %s198 = sadd.s32 %s196, %s197
        %s199 = smul.addr %s198, 4
        %s200 = scalar_lea.vmem %s0, %s199
        %p201 = pneg %p53
        %p202 = pneg %p50
        %p203 = pneg %p74
        %p204 = pneg %p71
        %p205 = pneg %p95
        %p206 = pneg %p92
        %p207 = pneg %p116
        %p208 = pneg %p113
        %p209 = pneg %p144
        %p210 = pneg %p141
        %s211 = sand.u32 %s131, 1
        %s212 = scalar_lea.sflag [#allocation3], %s211
        %s213 = sand.u32 %s131, 1
        %s214 = smul.addr %s213, 8
        %s215 = scalar_lea.vmem [#allocation2], %s214
        %s216 = smul.u32 128, %s23
        %p217 = scmp.lt.s32.totalorder %s22, 1
        %s218 = scalar_select %p217, %s22, 1
        %p219 = scmp.lt.s32.totalorder %s216, 255
        %s220 = scalar_select %p219, %s216, 255
        %s221 = smul.addr %s218, 256
        %s222 = sadd.s32 %s220, %s221
        %s223 = smul.addr %s222, 4
        %s224 = scalar_lea.vmem %s0, %s223
        %s225 = smul.u32 128, %s23
        %v227 = vld [vmem:[%s224] sm:$0xf]
        %v228 = vld [vmem:[%s224 + $0x4] sm:$0xf]
        %v229 = vld [vmem:[%s224 + $0x8] sm:$0xf]
        %v230 = vld [vmem:[%s224 + $0xc] sm:$0xf]
        %v231 = vld [vmem:[%s224 + $0x10] sm:$0xf]
        %v232 = vld [vmem:[%s224 + $0x14] sm:$0xf]
        %v233 = vld [vmem:[%s224 + $0x18] sm:$0xf]
        %v234 = vld [vmem:[%s224 + $0x1c] sm:$0xf]
        %v235 = vld [vmem:[%s224 + $0x20] sm:$0xf]
        %v236 = vld [vmem:[%s224 + $0x24] sm:$0xf]
        %v237 = vld [vmem:[%s224 + $0x28] sm:$0xf]
        %v238 = vld [vmem:[%s224 + $0x2c] sm:$0xf]
        %v239 = vld [vmem:[%s224 + $0x30] sm:$0xf]
        %v240 = vld [vmem:[%s224 + $0x34] sm:$0xf]
        %v241 = vld [vmem:[%s224 + $0x38] sm:$0xf]
        %v242 = vld [vmem:[%s224 + $0x3c] sm:$0xf]
        %v243 = vld [vmem:[%s224 + $0x40] sm:$0xf]
        %v244 = vld [vmem:[%s224 + $0x44] sm:$0xf]
        %v245 = vld [vmem:[%s224 + $0x48] sm:$0xf]
        %v246 = vld [vmem:[%s224 + $0x4c] sm:$0xf]
        %v247 = vld [vmem:[%s224 + $0x50] sm:$0xf]
        %v248 = vld [vmem:[%s224 + $0x54] sm:$0xf]
        %v249 = vld [vmem:[%s224 + $0x58] sm:$0xf]
        %v250 = vld [vmem:[%s224 + $0x5c] sm:$0xf]
        %v251 = vld [vmem:[%s224 + $0x60] sm:$0xf]
        %v252 = vld [vmem:[%s224 + $0x64] sm:$0xf]
        %v253 = vld [vmem:[%s224 + $0x68] sm:$0xf]
        %v254 = vld [vmem:[%s224 + $0x6c] sm:$0xf]
        %v255 = vld [vmem:[%s224 + $0x70] sm:$0xf]
        %v256 = vld [vmem:[%s224 + $0x74] sm:$0xf]
        %v257 = vld [vmem:[%s224 + $0x78] sm:$0xf]
        %v258 = vld [vmem:[%s224 + $0x7c] sm:$0xf]
        %v259 = vld [vmem:[%s224 + $0x80] sm:$0xf]
        %v260 = vld [vmem:[%s224 + $0x84] sm:$0xf]
        %v261 = vld [vmem:[%s224 + $0x88] sm:$0xf]
        %v262 = vld [vmem:[%s224 + $0x8c] sm:$0xf]
        %v263 = vld [vmem:[%s224 + $0x90] sm:$0xf]
        %v264 = vld [vmem:[%s224 + $0x94] sm:$0xf]
        %v265 = vld [vmem:[%s224 + $0x98] sm:$0xf]
        %v266 = vld [vmem:[%s224 + $0x9c] sm:$0xf]
        %v267 = vld [vmem:[%s224 + $0xa0] sm:$0xf]
        %v268 = vld [vmem:[%s224 + $0xa4] sm:$0xf]
        %v269 = vld [vmem:[%s224 + $0xa8] sm:$0xf]
        %v270 = vld [vmem:[%s224 + $0xac] sm:$0xf]
        %v271 = vld [vmem:[%s224 + $0xb0] sm:$0xf]
        %v272 = vld [vmem:[%s224 + $0xb4] sm:$0xf]
        %v273 = vld [vmem:[%s224 + $0xb8] sm:$0xf]
        %v274 = vld [vmem:[%s224 + $0xbc] sm:$0xf]
        %v275 = vld [vmem:[%s224 + $0xc0] sm:$0xf]
        %v276 = vld [vmem:[%s224 + $0xc4] sm:$0xf]
        %v277 = vld [vmem:[%s224 + $0xc8] sm:$0xf]
        %v278 = vld [vmem:[%s224 + $0xcc] sm:$0xf]
        %v279 = vld [vmem:[%s224 + $0xd0] sm:$0xf]
        %v280 = vld [vmem:[%s224 + $0xd4] sm:$0xf]
        %v281 = vld [vmem:[%s224 + $0xd8] sm:$0xf]
        %v282 = vld [vmem:[%s224 + $0xdc] sm:$0xf]
        %v283 = vld [vmem:[%s224 + $0xe0] sm:$0xf]
        %v284 = vld [vmem:[%s224 + $0xe4] sm:$0xf]
        %v285 = vld [vmem:[%s224 + $0xe8] sm:$0xf]
        %v286 = vld [vmem:[%s224 + $0xec] sm:$0xf]
        %v287 = vld [vmem:[%s224 + $0xf0] sm:$0xf]
        %v288 = vld [vmem:[%s224 + $0xf4] sm:$0xf]
        %v289 = vld [vmem:[%s224 + $0xf8] sm:$0xf]
        %v290 = vld [vmem:[%s224 + $0xfc] sm:$0xf]
        %v291 = vld [vmem:[%s224 + $0x100] sm:$0xf]
        %v292 = vld [vmem:[%s224 + $0x104] sm:$0xf]
        %v293 = vld [vmem:[%s224 + $0x108] sm:$0xf]
        %v294 = vld [vmem:[%s224 + $0x10c] sm:$0xf]
        %v295 = vld [vmem:[%s224 + $0x110] sm:$0xf]
        %v296 = vld [vmem:[%s224 + $0x114] sm:$0xf]
        %v297 = vld [vmem:[%s224 + $0x118] sm:$0xf]
        %v298 = vld [vmem:[%s224 + $0x11c] sm:$0xf]
        %v299 = vld [vmem:[%s224 + $0x120] sm:$0xf]
        %v300 = vld [vmem:[%s224 + $0x124] sm:$0xf]
        %v301 = vld [vmem:[%s224 + $0x128] sm:$0xf]
        %v302 = vld [vmem:[%s224 + $0x12c] sm:$0xf]
        %v303 = vld [vmem:[%s224 + $0x130] sm:$0xf]
        %v304 = vld [vmem:[%s224 + $0x134] sm:$0xf]
        %v305 = vld [vmem:[%s224 + $0x138] sm:$0xf]
        %v306 = vld [vmem:[%s224 + $0x13c] sm:$0xf]
        %v307 = vld [vmem:[%s224 + $0x140] sm:$0xf]
        %v308 = vld [vmem:[%s224 + $0x144] sm:$0xf]
        %v309 = vld [vmem:[%s224 + $0x148] sm:$0xf]
        %v310 = vld [vmem:[%s224 + $0x14c] sm:$0xf]
        %v311 = vld [vmem:[%s224 + $0x150] sm:$0xf]
        %v312 = vld [vmem:[%s224 + $0x154] sm:$0xf]
        %v313 = vld [vmem:[%s224 + $0x158] sm:$0xf]
        %v314 = vld [vmem:[%s224 + $0x15c] sm:$0xf]
        %v315 = vld [vmem:[%s224 + $0x160] sm:$0xf]
        %v316 = vld [vmem:[%s224 + $0x164] sm:$0xf]
        %v317 = vld [vmem:[%s224 + $0x168] sm:$0xf]
        %v318 = vld [vmem:[%s224 + $0x16c] sm:$0xf]
        %v319 = vld [vmem:[%s224 + $0x170] sm:$0xf]
        %v320 = vld [vmem:[%s224 + $0x174] sm:$0xf]
        %v321 = vld [vmem:[%s224 + $0x178] sm:$0xf]
        %v322 = vld [vmem:[%s224 + $0x17c] sm:$0xf]
        %v323 = vld [vmem:[%s224 + $0x180] sm:$0xf]
        %v324 = vld [vmem:[%s224 + $0x184] sm:$0xf]
        %v325 = vld [vmem:[%s224 + $0x188] sm:$0xf]
        %v326 = vld [vmem:[%s224 + $0x18c] sm:$0xf]
        %v327 = vld [vmem:[%s224 + $0x190] sm:$0xf]
        %v328 = vld [vmem:[%s224 + $0x194] sm:$0xf]
        %v329 = vld [vmem:[%s224 + $0x198] sm:$0xf]
        %v330 = vld [vmem:[%s224 + $0x19c] sm:$0xf]
        %v331 = vld [vmem:[%s224 + $0x1a0] sm:$0xf]
        %v332 = vld [vmem:[%s224 + $0x1a4] sm:$0xf]
        %v333 = vld [vmem:[%s224 + $0x1a8] sm:$0xf]
        %v334 = vld [vmem:[%s224 + $0x1ac] sm:$0xf]
        %v335 = vld [vmem:[%s224 + $0x1b0] sm:$0xf]
        %v336 = vld [vmem:[%s224 + $0x1b4] sm:$0xf]
        %v337 = vld [vmem:[%s224 + $0x1b8] sm:$0xf]
        %v338 = vld [vmem:[%s224 + $0x1bc] sm:$0xf]
        %v339 = vld [vmem:[%s224 + $0x1c0] sm:$0xf]
        %v340 = vld [vmem:[%s224 + $0x1c4] sm:$0xf]
        %v341 = vld [vmem:[%s224 + $0x1c8] sm:$0xf]
        %v342 = vld [vmem:[%s224 + $0x1cc] sm:$0xf]
        %v343 = vld [vmem:[%s224 + $0x1d0] sm:$0xf]
        %v344 = vld [vmem:[%s224 + $0x1d4] sm:$0xf]
        %v345 = vld [vmem:[%s224 + $0x1d8] sm:$0xf]
        %v346 = vld [vmem:[%s224 + $0x1dc] sm:$0xf]
        %v347 = vld [vmem:[%s224 + $0x1e0] sm:$0xf]
        %v348 = vld [vmem:[%s224 + $0x1e4] sm:$0xf]
        %v349 = vld [vmem:[%s224 + $0x1e8] sm:$0xf]
        %v350 = vld [vmem:[%s224 + $0x1ec] sm:$0xf]
        %v351 = vld [vmem:[%s224 + $0x1f0] sm:$0xf]
        %v352 = vld [vmem:[%s224 + $0x1f4] sm:$0xf]
        %v353 = vld [vmem:[%s224 + $0x1f8] sm:$0xf]
        %v354 = vld [vmem:[%s224 + $0x1fc] sm:$0xf]
        %v355 = vld [vmem:[%s1] sm:$0x7]
        %v484 = vunpack.c.l.b16 %v227
        %v485 = vunpack.c.l.b16 %v228
        %v486 = vunpack.c.l.b16 %v229
        %v487 = vunpack.c.l.b16 %v230
        %v488 = vunpack.c.l.b16 %v231
        %v489 = vunpack.c.l.b16 %v232
        %v490 = vunpack.c.l.b16 %v233
        %v491 = vunpack.c.l.b16 %v234
        %v492 = vunpack.c.l.b16 %v235
        %v493 = vunpack.c.l.b16 %v236
        %v494 = vunpack.c.l.b16 %v237
        %v495 = vunpack.c.l.b16 %v238
        %v496 = vunpack.c.l.b16 %v239
        %v497 = vunpack.c.l.b16 %v240
        %v498 = vunpack.c.l.b16 %v241
        %v499 = vunpack.c.l.b16 %v242
        %v500 = vunpack.c.l.b16 %v243
        %v501 = vunpack.c.l.b16 %v244
        %v502 = vunpack.c.l.b16 %v245
        %v503 = vunpack.c.l.b16 %v246
        %v504 = vunpack.c.l.b16 %v247
        %v505 = vunpack.c.l.b16 %v248
        %v506 = vunpack.c.l.b16 %v249
        %v507 = vunpack.c.l.b16 %v250
        %v508 = vunpack.c.l.b16 %v251
        %v509 = vunpack.c.l.b16 %v252
        %v510 = vunpack.c.l.b16 %v253
        %v511 = vunpack.c.l.b16 %v254
        %v512 = vunpack.c.l.b16 %v255
        %v513 = vunpack.c.l.b16 %v256
        %v514 = vunpack.c.l.b16 %v257
        %v515 = vunpack.c.l.b16 %v258
        %v516 = vunpack.c.l.b16 %v259
        %v517 = vunpack.c.l.b16 %v260
        %v518 = vunpack.c.l.b16 %v261
        %v519 = vunpack.c.l.b16 %v262
        %v520 = vunpack.c.l.b16 %v263
        %v521 = vunpack.c.l.b16 %v264
        %v522 = vunpack.c.l.b16 %v265
        %v523 = vunpack.c.l.b16 %v266
        %v524 = vunpack.c.l.b16 %v267
        %v525 = vunpack.c.l.b16 %v268
        %v526 = vunpack.c.l.b16 %v269
        %v527 = vunpack.c.l.b16 %v270
        %v528 = vunpack.c.l.b16 %v271
        %v529 = vunpack.c.l.b16 %v272
        %v530 = vunpack.c.l.b16 %v273
        %v531 = vunpack.c.l.b16 %v274
        %v532 = vunpack.c.l.b16 %v275
        %v533 = vunpack.c.l.b16 %v276
        %v534 = vunpack.c.l.b16 %v277
        %v535 = vunpack.c.l.b16 %v278
        %v536 = vunpack.c.l.b16 %v279
        %v537 = vunpack.c.l.b16 %v280
        %v538 = vunpack.c.l.b16 %v281
        %v539 = vunpack.c.l.b16 %v282
        %v540 = vunpack.c.l.b16 %v283
        %v541 = vunpack.c.l.b16 %v284
        %v542 = vunpack.c.l.b16 %v285
        %v543 = vunpack.c.l.b16 %v286
        %v544 = vunpack.c.l.b16 %v287
        %v545 = vunpack.c.l.b16 %v288
        %v546 = vunpack.c.l.b16 %v289
        %v547 = vunpack.c.l.b16 %v290
        %v548 = vunpack.c.l.b16 %v291
        %v549 = vunpack.c.l.b16 %v292
        %v550 = vunpack.c.l.b16 %v293
        %v551 = vunpack.c.l.b16 %v294
        %v552 = vunpack.c.l.b16 %v295
        %v553 = vunpack.c.l.b16 %v296
        %v554 = vunpack.c.l.b16 %v297
        %v555 = vunpack.c.l.b16 %v298
        %v556 = vunpack.c.l.b16 %v299
        %v557 = vunpack.c.l.b16 %v300
        %v558 = vunpack.c.l.b16 %v301
        %v559 = vunpack.c.l.b16 %v302
        %v560 = vunpack.c.l.b16 %v303
        %v561 = vunpack.c.l.b16 %v304
        %v562 = vunpack.c.l.b16 %v305
        %v563 = vunpack.c.l.b16 %v306
        %v564 = vunpack.c.l.b16 %v307
        %v565 = vunpack.c.l.b16 %v308
        %v566 = vunpack.c.l.b16 %v309
        %v567 = vunpack.c.l.b16 %v310
        %v568 = vunpack.c.l.b16 %v311
        %v569 = vunpack.c.l.b16 %v312
        %v570 = vunpack.c.l.b16 %v313
        %v571 = vunpack.c.l.b16 %v314
        %v572 = vunpack.c.l.b16 %v315
        %v573 = vunpack.c.l.b16 %v316
        %v574 = vunpack.c.l.b16 %v317
        %v575 = vunpack.c.l.b16 %v318
        %v576 = vunpack.c.l.b16 %v319
        %v577 = vunpack.c.l.b16 %v320
        %v578 = vunpack.c.l.b16 %v321
        %v579 = vunpack.c.l.b16 %v322
        %v580 = vunpack.c.l.b16 %v323
        %v581 = vunpack.c.l.b16 %v324
        %v582 = vunpack.c.l.b16 %v325
        %v583 = vunpack.c.l.b16 %v326
        %v584 = vunpack.c.l.b16 %v327
        %v585 = vunpack.c.l.b16 %v328
        %v586 = vunpack.c.l.b16 %v329
        %v587 = vunpack.c.l.b16 %v330
        %v588 = vunpack.c.l.b16 %v331
        %v589 = vunpack.c.l.b16 %v332
        %v590 = vunpack.c.l.b16 %v333
        %v591 = vunpack.c.l.b16 %v334
        %v592 = vunpack.c.l.b16 %v335
        %v593 = vunpack.c.l.b16 %v336
        %v594 = vunpack.c.l.b16 %v337
        %v595 = vunpack.c.l.b16 %v338
        %v596 = vunpack.c.l.b16 %v339
        %v597 = vunpack.c.l.b16 %v340
        %v598 = vunpack.c.l.b16 %v341
        %v599 = vunpack.c.l.b16 %v342
        %v600 = vunpack.c.l.b16 %v343
        %v601 = vunpack.c.l.b16 %v344
        %v602 = vunpack.c.l.b16 %v345
        %v603 = vunpack.c.l.b16 %v346
        %v604 = vunpack.c.l.b16 %v347
        %v605 = vunpack.c.l.b16 %v348
        %v606 = vunpack.c.l.b16 %v349
        %v607 = vunpack.c.l.b16 %v350
        %v608 = vunpack.c.l.b16 %v351
        %v609 = vunpack.c.l.b16 %v352
        %v610 = vunpack.c.l.b16 %v353
        %v611 = vunpack.c.l.b16 %v354
        %v612 = vpack.c.b16 %v485, %v484
        %v613 = vpack.c.b16 %v487, %v486
        %v614 = vpack.c.b16 %v489, %v488
        %v615 = vpack.c.b16 %v491, %v490
        %v616 = vpack.c.b16 %v493, %v492
        %v617 = vpack.c.b16 %v495, %v494
        %v618 = vpack.c.b16 %v497, %v496
        %v619 = vpack.c.b16 %v499, %v498
        %v620 = vpack.c.b16 %v501, %v500
        %v621 = vpack.c.b16 %v503, %v502
        %v622 = vpack.c.b16 %v505, %v504
        %v623 = vpack.c.b16 %v507, %v506
        %v624 = vpack.c.b16 %v509, %v508
        %v625 = vpack.c.b16 %v511, %v510
        %v626 = vpack.c.b16 %v513, %v512
        %v627 = vpack.c.b16 %v515, %v514
        %v628 = vpack.c.b16 %v517, %v516
        %v629 = vpack.c.b16 %v519, %v518
        %v630 = vpack.c.b16 %v521, %v520
        %v631 = vpack.c.b16 %v523, %v522
        %v632 = vpack.c.b16 %v525, %v524
        %v633 = vpack.c.b16 %v527, %v526
        %v634 = vpack.c.b16 %v529, %v528
        %v635 = vpack.c.b16 %v531, %v530
        %v636 = vpack.c.b16 %v533, %v532
        %v637 = vpack.c.b16 %v535, %v534
        %v638 = vpack.c.b16 %v537, %v536
        %v639 = vpack.c.b16 %v539, %v538
        %v640 = vpack.c.b16 %v541, %v540
        %v641 = vpack.c.b16 %v543, %v542
        %v642 = vpack.c.b16 %v545, %v544
        %v643 = vpack.c.b16 %v547, %v546
        %v644 = vpack.c.b16 %v549, %v548
        %v645 = vpack.c.b16 %v551, %v550
        %v646 = vpack.c.b16 %v553, %v552
        %v647 = vpack.c.b16 %v555, %v554
        %v648 = vpack.c.b16 %v557, %v556
        %v649 = vpack.c.b16 %v559, %v558
        %v650 = vpack.c.b16 %v561, %v560
        %v651 = vpack.c.b16 %v563, %v562
        %v652 = vpack.c.b16 %v565, %v564
        %v653 = vpack.c.b16 %v567, %v566
        %v654 = vpack.c.b16 %v569, %v568
        %v655 = vpack.c.b16 %v571, %v570
        %v656 = vpack.c.b16 %v573, %v572
        %v657 = vpack.c.b16 %v575, %v574
        %v658 = vpack.c.b16 %v577, %v576
        %v659 = vpack.c.b16 %v579, %v578
        %v660 = vpack.c.b16 %v581, %v580
        %v661 = vpack.c.b16 %v583, %v582
        %v662 = vpack.c.b16 %v585, %v584
        %v663 = vpack.c.b16 %v587, %v586
        %v664 = vpack.c.b16 %v589, %v588
        %v665 = vpack.c.b16 %v591, %v590
        %v666 = vpack.c.b16 %v593, %v592
        %v667 = vpack.c.b16 %v595, %v594
        %v668 = vpack.c.b16 %v597, %v596
        %v669 = vpack.c.b16 %v599, %v598
        %v670 = vpack.c.b16 %v601, %v600
        %v671 = vpack.c.b16 %v603, %v602
        %v672 = vpack.c.b16 %v605, %v604
        %v673 = vpack.c.b16 %v607, %v606
        %v674 = vpack.c.b16 %v609, %v608
        %v675 = vpack.c.b16 %v611, %v610
        %vm676 = vcmask 48128
        %v678 = vsel %vm676, %v612, 0
        %v681 = vsel %vm676, %v613, 0
        %v684 = vsel %vm676, %v614, 0
        %v687 = vsel %vm676, %v615, 0
        %v690 = vsel %vm676, %v616, 0
        %v693 = vsel %vm676, %v617, 0
        %v696 = vsel %vm676, %v618, 0
        %v699 = vsel %vm676, %v619, 0
        %v702 = vsel %vm676, %v620, 0
        %v705 = vsel %vm676, %v621, 0
        %v708 = vsel %vm676, %v622, 0
        %v711 = vsel %vm676, %v623, 0
        %v714 = vsel %vm676, %v624, 0
        %v717 = vsel %vm676, %v625, 0
        %v720 = vsel %vm676, %v626, 0
        %v723 = vsel %vm676, %v627, 0
        %v726 = vsel %vm676, %v628, 0
        %v729 = vsel %vm676, %v629, 0
        %v732 = vsel %vm676, %v630, 0
        %v735 = vsel %vm676, %v631, 0
        %v738 = vsel %vm676, %v632, 0
        %v741 = vsel %vm676, %v633, 0
        %v744 = vsel %vm676, %v634, 0
        %v747 = vsel %vm676, %v635, 0
        %v750 = vsel %vm676, %v636, 0
        %v753 = vsel %vm676, %v637, 0
        %v756 = vsel %vm676, %v638, 0
        %v759 = vsel %vm676, %v639, 0
        %v762 = vsel %vm676, %v640, 0
        %v765 = vsel %vm676, %v641, 0
        %v768 = vsel %vm676, %v642, 0
        %v771 = vsel %vm676, %v643, 0
        %v774 = vsel %vm676, %v644, 0
        %v777 = vsel %vm676, %v645, 0
        %v780 = vsel %vm676, %v646, 0
        %v783 = vsel %vm676, %v647, 0
        %v786 = vsel %vm676, %v648, 0
        %v789 = vsel %vm676, %v649, 0
        %v792 = vsel %vm676, %v650, 0
        %v795 = vsel %vm676, %v651, 0
        %v798 = vsel %vm676, %v652, 0
        %v801 = vsel %vm676, %v653, 0
        %v804 = vsel %vm676, %v654, 0
        %v807 = vsel %vm676, %v655, 0
        %v810 = vsel %vm676, %v656, 0
        %v813 = vsel %vm676, %v657, 0
        %v816 = vsel %vm676, %v658, 0
        %v819 = vsel %vm676, %v659, 0
        %v822 = vsel %vm676, %v660, 0
        %v825 = vsel %vm676, %v661, 0
        %v828 = vsel %vm676, %v662, 0
        %v831 = vsel %vm676, %v663, 0
        %v834 = vsel %vm676, %v664, 0
        %v837 = vsel %vm676, %v665, 0
        %v840 = vsel %vm676, %v666, 0
        %v843 = vsel %vm676, %v667, 0
        %v846 = vsel %vm676, %v668, 0
        %v849 = vsel %vm676, %v669, 0
        %v852 = vsel %vm676, %v670, 0
        %v855 = vsel %vm676, %v671, 0
        %v858 = vsel %vm676, %v672, 0
        %v861 = vsel %vm676, %v673, 0
        %v864 = vsel %vm676, %v674, 0
        %v867 = vsel %vm676, %v675, 0
        %vm869 = vcmask 1042432
        %v871 = vsel %vm869, %v355, 0
        %873 = vmatprep.subr.bf16.mxu0 0
        %874 = vmatpush1.bf16.msra.mxu0 %v871
        %875 = vmatprep.subr.bf16.mxu0 0
        %876 = vmatpush1.bf16.msra.mxu0 0
        %877 = vmatprep.subr.bf16.mxu0 0
        %878 = vmatpush1.bf16.msra.mxu0 0
        %879 = vmatprep.subr.bf16.mxu0 0
        %880 = vmatpush1.bf16.msra.mxu0 0
        %881 = vmatprep.subr.bf16.mxu0 0
        %882 = vmatpush1.bf16.msra.mxu0 0
        %883 = vmatprep.subr.bf16.mxu0 0
        %884 = vmatpush1.bf16.msra.mxu0 0
        %885 = vmatprep.subr.bf16.mxu0 0
        %886 = vmatpush1.bf16.msra.mxu0 0
        %887 = vmatprep.subr.bf16.mxu0 0
        %888 = vmatpush1.bf16.msra.mxu0 0
        %889 = vmatprep.subr.bf16.mxu0 0
        %890 = vmatpush1.bf16.msra.mxu0 0
        %891 = vmatprep.subr.bf16.mxu0 0
        %892 = vmatpush1.bf16.msra.mxu0 0
        %893 = vmatprep.subr.bf16.mxu0 0
        %894 = vmatpush1.bf16.msra.mxu0 0
        %895 = vmatprep.subr.bf16.mxu0 0
        %896 = vmatpush1.bf16.msra.mxu0 0
        %897 = vmatprep.subr.bf16.mxu0 0
        %898 = vmatpush1.bf16.msra.mxu0 0
        %899 = vmatprep.subr.bf16.mxu0 0
        %900 = vmatpush1.bf16.msra.mxu0 0
        %901 = vmatprep.subr.bf16.mxu0 0
        %902 = vmatpush1.bf16.msra.mxu0 0
        %903 = vmatprep.subr.bf16.mxu0 0
        %904 = vmatpush1.bf16.msra.mxu0 0
        %905 = vmatprep.mubr.bf16.mxu0 0
        %906 = vmatmul.mubr.bf16.gmra.mrb[0].mxu0 %v678
        %v907 = vpop.f32.mrb[0].mxu0
        %v908 = vadd.f32 0.0, %v907
        %v909 = vpop.f32.mrb[0].mxu0
        %v910 = vpop.f32.mrb[0].mxu0
        %v911 = vadd.f32 0.0, %v910
        %v912 = vpop.f32.mrb[0].mxu0
        %913 = vmatprep.mubr.bf16.mxu0 0
        %914 = vmatmul.mubr.bf16.gmra.mrb[0].mxu0 %v681
        %v915 = vpop.f32.mrb[0].mxu0
        %v916 = vadd.f32 0.0, %v915
        %v917 = vpop.f32.mrb[0].mxu0
        %v918 = vpop.f32.mrb[0].mxu0
        %v919 = vadd.f32 0.0, %v918
        %v920 = vpop.f32.mrb[0].mxu0
        %921 = vmatprep.mubr.bf16.mxu0 0
        %922 = vmatmul.mubr.bf16.gmra.mrb[0].mxu0 %v684
        %v923 = vpop.f32.mrb[0].mxu0
        %v924 = vadd.f32 0.0, %v923
        %v925 = vpop.f32.mrb[0].mxu0
        %v926 = vpop.f32.mrb[0].mxu0
        %v927 = vadd.f32 0.0, %v926
        %v928 = vpop.f32.mrb[0].mxu0
        %929 = vmatprep.mubr.bf16.mxu0 0
        %930 = vmatmul.mubr.bf16.gmra.mrb[0].mxu0 %v687
        %v931 = vpop.f32.mrb[0].mxu0
        %v932 = vadd.f32 0.0, %v931
        %v933 = vpop.f32.mrb[0].mxu0
        %v934 = vpop.f32.mrb[0].mxu0
        %v935 = vadd.f32 0.0, %v934
        %v936 = vpop.f32.mrb[0].mxu0
        %937 = vmatprep.mubr.bf16.mxu0 0
        %938 = vmatmul.mubr.bf16.gmra.mrb[0].mxu0 %v690
        %v939 = vpop.f32.mrb[0].mxu0
        %v940 = vadd.f32 0.0, %v939
        %v941 = vpop.f32.mrb[0].mxu0
        %v942 = vpop.f32.mrb[0].mxu0
        %v943 = vadd.f32 0.0, %v942
        %v944 = vpop.f32.mrb[0].mxu0
        %945 = vmatprep.mubr.bf16.mxu0 0
        %946 = vmatmul.mubr.bf16.gmra.mrb[0].mxu0 %v693
        %v947 = vpop.f32.mrb[0].mxu0
        %v948 = vadd.f32 0.0, %v947
        %v949 = vpop.f32.mrb[0].mxu0
        %v950 = vpop.f32.mrb[0].mxu0
        %v951 = vadd.f32 0.0, %v950
        %v952 = vpop.f32.mrb[0].mxu0
        %953 = vmatprep.mubr.bf16.mxu0 0
        %954 = vmatmul.mubr.bf16.gmra.mrb[0].mxu0 %v696
        %v955 = vpop.f32.mrb[0].mxu0
        %v956 = vadd.f32 0.0, %v955
        %v957 = vpop.f32.mrb[0].mxu0
        %v958 = vpop.f32.mrb[0].mxu0
        %v959 = vadd.f32 0.0, %v958
        %v960 = vpop.f32.mrb[0].mxu0
        %961 = vmatprep.mubr.bf16.mxu0 0
        %962 = vmatmul.mubr.bf16.gmra.mrb[0].mxu0 %v699
        %v963 = vpop.f32.mrb[0].mxu0
        %v964 = vadd.f32 0.0, %v963
        %v965 = vpop.f32.mrb[0].mxu0
        %v966 = vpop.f32.mrb[0].mxu0
        %v967 = vadd.f32 0.0, %v966
        %v968 = vpop.f32.mrb[0].mxu0
        %969 = vmatprep.mubr.bf16.mxu0 0
        %970 = vmatmul.mubr.bf16.gmra.mrb[0].mxu0 %v702
        %v971 = vpop.f32.mrb[0].mxu0
        %v972 = vadd.f32 0.0, %v971
        %v973 = vpop.f32.mrb[0].mxu0
        %v974 = vpop.f32.mrb[0].mxu0
        %v975 = vadd.f32 0.0, %v974
        %v976 = vpop.f32.mrb[0].mxu0
        %977 = vmatprep.mubr.bf16.mxu0 0
        %978 = vmatmul.mubr.bf16.gmra.mrb[0].mxu0 %v705
        %v979 = vpop.f32.mrb[0].mxu0
        %v980 = vadd.f32 0.0, %v979
        %v981 = vpop.f32.mrb[0].mxu0
        %v982 = vpop.f32.mrb[0].mxu0
        %v983 = vadd.f32 0.0, %v982
        %v984 = vpop.f32.mrb[0].mxu0
        %985 = vmatprep.mubr.bf16.mxu0 0
        %986 = vmatmul.mubr.bf16.gmra.mrb[0].mxu0 %v708
        %v987 = vpop.f32.mrb[0].mxu0
        %v988 = vadd.f32 0.0, %v987
        %v989 = vpop.f32.mrb[0].mxu0
        %v990 = vpop.f32.mrb[0].mxu0
        %v991 = vadd.f32 0.0, %v990
        %v992 = vpop.f32.mrb[0].mxu0
        %993 = vmatprep.mubr.bf16.mxu0 0
        %994 = vmatmul.mubr.bf16.gmra.mrb[0].mxu0 %v711
        %v995 = vpop.f32.mrb[0].mxu0
        %v996 = vadd.f32 0.0, %v995
        %v997 = vpop.f32.mrb[0].mxu0
        %v998 = vpop.f32.mrb[0].mxu0
        %v999 = vadd.f32 0.0, %v998
        %v1000 = vpop.f32.mrb[0].mxu0
        %1001 = vmatprep.mubr.bf16.mxu0 0
        %1002 = vmatmul.mubr.bf16.gmra.mrb[0].mxu0 %v714
        %v1003 = vpop.f32.mrb[0].mxu0
        %v1004 = vadd.f32 0.0, %v1003
        %v1005 = vpop.f32.mrb[0].mxu0
        %v1006 = vpop.f32.mrb[0].mxu0
        %v1007 = vadd.f32 0.0, %v1006
        %v1008 = vpop.f32.mrb[0].mxu0
        %1009 = vmatprep.mubr.bf16.mxu0 0
        %1010 = vmatmul.mubr.bf16.gmra.mrb[0].mxu0 %v717
        %v1011 = vpop.f32.mrb[0].mxu0
        %v1012 = vadd.f32 0.0, %v1011
        %v1013 = vpop.f32.mrb[0].mxu0
        %v1014 = vpop.f32.mrb[0].mxu0
        %v1015 = vadd.f32 0.0, %v1014
        %v1016 = vpop.f32.mrb[0].mxu0
        %1017 = vmatprep.mubr.bf16.mxu0 0
        %1018 = vmatmul.mubr.bf16.gmra.mrb[0].mxu0 %v720
        %v1019 = vpop.f32.mrb[0].mxu0
        %v1020 = vadd.f32 0.0, %v1019
        %v1021 = vpop.f32.mrb[0].mxu0
        %v1022 = vpop.f32.mrb[0].mxu0
        %v1023 = vadd.f32 0.0, %v1022
        %v1024 = vpop.f32.mrb[0].mxu0
        %1025 = vmatprep.mubr.bf16.mxu0 0
        %1026 = vmatmul.mubr.bf16.gmra.mrb[0].mxu0 %v723
        %v1027 = vpop.f32.mrb[0].mxu0
        %v1028 = vadd.f32 0.0, %v1027
        %v1029 = vpop.f32.mrb[0].mxu0
        %v1030 = vpop.f32.mrb[0].mxu0
        %v1031 = vadd.f32 0.0, %v1030
        %v1032 = vpop.f32.mrb[0].mxu0
        %1033 = vmatprep.mubr.bf16.mxu0 0
        %1034 = vmatmul.mubr.bf16.gmra.mrb[0].mxu0 %v726
        %v1035 = vpop.f32.mrb[0].mxu0
        %v1036 = vadd.f32 0.0, %v1035
        %v1037 = vpop.f32.mrb[0].mxu0
        %v1038 = vpop.f32.mrb[0].mxu0
        %v1039 = vadd.f32 0.0, %v1038
        %v1040 = vpop.f32.mrb[0].mxu0
        %1041 = vmatprep.mubr.bf16.mxu0 0
        %1042 = vmatmul.mubr.bf16.gmra.mrb[0].mxu0 %v729
        %v1043 = vpop.f32.mrb[0].mxu0
        %v1044 = vadd.f32 0.0, %v1043
        %v1045 = vpop.f32.mrb[0].mxu0
        %v1046 = vpop.f32.mrb[0].mxu0
        %v1047 = vadd.f32 0.0, %v1046
        %v1048 = vpop.f32.mrb[0].mxu0
        %1049 = vmatprep.mubr.bf16.mxu0 0
        %1050 = vmatmul.mubr.bf16.gmra.mrb[0].mxu0 %v732
        %v1051 = vpop.f32.mrb[0].mxu0
        %v1052 = vadd.f32 0.0, %v1051
        %v1053 = vpop.f32.mrb[0].mxu0
        %v1054 = vpop.f32.mrb[0].mxu0
        %v1055 = vadd.f32 0.0, %v1054
        %v1056 = vpop.f32.mrb[0].mxu0
        %1057 = vmatprep.mubr.bf16.mxu0 0
        %1058 = vmatmul.mubr.bf16.gmra.mrb[0].mxu0 %v735
        %v1059 = vpop.f32.mrb[0].mxu0
        %v1060 = vadd.f32 0.0, %v1059
        %v1061 = vpop.f32.mrb[0].mxu0
        %v1062 = vpop.f32.mrb[0].mxu0
        %v1063 = vadd.f32 0.0, %v1062
        %v1064 = vpop.f32.mrb[0].mxu0
        %1065 = vmatprep.mubr.bf16.mxu0 0
        %1066 = vmatmul.mubr.bf16.gmra.mrb[0].mxu0 %v738
        %v1067 = vpop.f32.mrb[0].mxu0
        %v1068 = vadd.f32 0.0, %v1067
        %v1069 = vpop.f32.mrb[0].mxu0
        %v1070 = vpop.f32.mrb[0].mxu0
        %v1071 = vadd.f32 0.0, %v1070
        %v1072 = vpop.f32.mrb[0].mxu0
        %1073 = vmatprep.mubr.bf16.mxu0 0
        %1074 = vmatmul.mubr.bf16.gmra.mrb[0].mxu0 %v741
        %v1075 = vpop.f32.mrb[0].mxu0
        %v1076 = vadd.f32 0.0, %v1075
        %v1077 = vpop.f32.mrb[0].mxu0
        %v1078 = vpop.f32.mrb[0].mxu0
        %v1079 = vadd.f32 0.0, %v1078
        %v1080 = vpop.f32.mrb[0].mxu0
        %1081 = vmatprep.mubr.bf16.mxu0 0
        %1082 = vmatmul.mubr.bf16.gmra.mrb[0].mxu0 %v744
        %v1083 = vpop.f32.mrb[0].mxu0
        %v1084 = vadd.f32 0.0, %v1083
        %v1085 = vpop.f32.mrb[0].mxu0
        %v1086 = vpop.f32.mrb[0].mxu0
        %v1087 = vadd.f32 0.0, %v1086
        %v1088 = vpop.f32.mrb[0].mxu0
        %1089 = vmatprep.mubr.bf16.mxu0 0
        %1090 = vmatmul.mubr.bf16.gmra.mrb[0].mxu0 %v747
        %v1091 = vpop.f32.mrb[0].mxu0
        %v1092 = vadd.f32 0.0, %v1091
        %v1093 = vpop.f32.mrb[0].mxu0
        %v1094 = vpop.f32.mrb[0].mxu0
        %v1095 = vadd.f32 0.0, %v1094
        %v1096 = vpop.f32.mrb[0].mxu0
        %1097 = vmatprep.mubr.bf16.mxu0 0
        %1098 = vmatmul.mubr.bf16.gmra.mrb[0].mxu0 %v750
        %v1099 = vpop.f32.mrb[0].mxu0
        %v1100 = vadd.f32 0.0, %v1099
        %v1101 = vpop.f32.mrb[0].mxu0
        %v1102 = vpop.f32.mrb[0].mxu0
        %v1103 = vadd.f32 0.0, %v1102
        %v1104 = vpop.f32.mrb[0].mxu0
        %1105 = vmatprep.mubr.bf16.mxu0 0
        %1106 = vmatmul.mubr.bf16.gmra.mrb[0].mxu0 %v753
        %v1107 = vpop.f32.mrb[0].mxu0
        %v1108 = vadd.f32 0.0, %v1107
        %v1109 = vpop.f32.mrb[0].mxu0
        %v1110 = vpop.f32.mrb[0].mxu0
        %v1111 = vadd.f32 0.0, %v1110
        %v1112 = vpop.f32.mrb[0].mxu0
        %1113 = vmatprep.mubr.bf16.mxu0 0
        %1114 = vmatmul.mubr.bf16.gmra.mrb[0].mxu0 %v756
        %v1115 = vpop.f32.mrb[0].mxu0
        %v1116 = vadd.f32 0.0, %v1115
        %v1117 = vpop.f32.mrb[0].mxu0
        %v1118 = vpop.f32.mrb[0].mxu0
        %v1119 = vadd.f32 0.0, %v1118
        %v1120 = vpop.f32.mrb[0].mxu0
        %1121 = vmatprep.mubr.bf16.mxu0 0
        %1122 = vmatmul.mubr.bf16.gmra.mrb[0].mxu0 %v759
        %v1123 = vpop.f32.mrb[0].mxu0
        %v1124 = vadd.f32 0.0, %v1123
        %v1125 = vpop.f32.mrb[0].mxu0
        %v1126 = vpop.f32.mrb[0].mxu0
        %v1127 = vadd.f32 0.0, %v1126
        %v1128 = vpop.f32.mrb[0].mxu0
        %1129 = vmatprep.mubr.bf16.mxu0 0
        %1130 = vmatmul.mubr.bf16.gmra.mrb[0].mxu0 %v762
        %v1131 = vpop.f32.mrb[0].mxu0
        %v1132 = vadd.f32 0.0, %v1131
        %v1133 = vpop.f32.mrb[0].mxu0
        %v1134 = vpop.f32.mrb[0].mxu0
        %v1135 = vadd.f32 0.0, %v1134
        %v1136 = vpop.f32.mrb[0].mxu0
        %1137 = vmatprep.mubr.bf16.mxu0 0
        %1138 = vmatmul.mubr.bf16.gmra.mrb[0].mxu0 %v765
        %v1139 = vpop.f32.mrb[0].mxu0
        %v1140 = vadd.f32 0.0, %v1139
        %v1141 = vpop.f32.mrb[0].mxu0
        %v1142 = vpop.f32.mrb[0].mxu0
        %v1143 = vadd.f32 0.0, %v1142
        %v1144 = vpop.f32.mrb[0].mxu0
        %1145 = vmatprep.mubr.bf16.mxu0 0
        %1146 = vmatmul.mubr.bf16.gmra.mrb[0].mxu0 %v768
        %v1147 = vpop.f32.mrb[0].mxu0
        %v1148 = vadd.f32 0.0, %v1147
        %v1149 = vpop.f32.mrb[0].mxu0
        %v1150 = vpop.f32.mrb[0].mxu0
        %v1151 = vadd.f32 0.0, %v1150
        %v1152 = vpop.f32.mrb[0].mxu0
        %1153 = vmatprep.mubr.bf16.mxu0 0
        %1154 = vmatmul.mubr.bf16.gmra.mrb[0].mxu0 %v771
        %v1155 = vpop.f32.mrb[0].mxu0
        %v1156 = vadd.f32 0.0, %v1155
        %v1157 = vpop.f32.mrb[0].mxu0
        %v1158 = vpop.f32.mrb[0].mxu0
        %v1159 = vadd.f32 0.0, %v1158
        %v1160 = vpop.f32.mrb[0].mxu0
        %1161 = vmatprep.mubr.bf16.mxu0 0
        %1162 = vmatmul.mubr.bf16.gmra.mrb[0].mxu0 %v774
        %v1163 = vpop.f32.mrb[0].mxu0
        %v1164 = vadd.f32 0.0, %v1163
        %v1165 = vpop.f32.mrb[0].mxu0
        %v1166 = vpop.f32.mrb[0].mxu0
        %v1167 = vadd.f32 0.0, %v1166
        %v1168 = vpop.f32.mrb[0].mxu0
        %1169 = vmatprep.mubr.bf16.mxu0 0
        %1170 = vmatmul.mubr.bf16.gmra.mrb[0].mxu0 %v777
        %v1171 = vpop.f32.mrb[0].mxu0
        %v1172 = vadd.f32 0.0, %v1171
        %v1173 = vpop.f32.mrb[0].mxu0
        %v1174 = vpop.f32.mrb[0].mxu0
        %v1175 = vadd.f32 0.0, %v1174
        %v1176 = vpop.f32.mrb[0].mxu0
        %1177 = vmatprep.mubr.bf16.mxu0 0
        %1178 = vmatmul.mubr.bf16.gmra.mrb[0].mxu0 %v780
        %v1179 = vpop.f32.mrb[0].mxu0
        %v1180 = vadd.f32 0.0, %v1179
        %v1181 = vpop.f32.mrb[0].mxu0
        %v1182 = vpop.f32.mrb[0].mxu0
        %v1183 = vadd.f32 0.0, %v1182
        %v1184 = vpop.f32.mrb[0].mxu0
        %1185 = vmatprep.mubr.bf16.mxu0 0
        %1186 = vmatmul.mubr.bf16.gmra.mrb[0].mxu0 %v783
        %v1187 = vpop.f32.mrb[0].mxu0
        %v1188 = vadd.f32 0.0, %v1187
        %v1189 = vpop.f32.mrb[0].mxu0
        %v1190 = vpop.f32.mrb[0].mxu0
        %v1191 = vadd.f32 0.0, %v1190
        %v1192 = vpop.f32.mrb[0].mxu0
        %1193 = vmatprep.mubr.bf16.mxu0 0
        %1194 = vmatmul.mubr.bf16.gmra.mrb[0].mxu0 %v786
        %v1195 = vpop.f32.mrb[0].mxu0
        %v1196 = vadd.f32 0.0, %v1195
        %v1197 = vpop.f32.mrb[0].mxu0
        %v1198 = vpop.f32.mrb[0].mxu0
        %v1199 = vadd.f32 0.0, %v1198
        %v1200 = vpop.f32.mrb[0].mxu0
        %1201 = vmatprep.mubr.bf16.mxu0 0
        %1202 = vmatmul.mubr.bf16.gmra.mrb[0].mxu0 %v789
        %v1203 = vpop.f32.mrb[0].mxu0
        %v1204 = vadd.f32 0.0, %v1203
        %v1205 = vpop.f32.mrb[0].mxu0
        %v1206 = vpop.f32.mrb[0].mxu0
        %v1207 = vadd.f32 0.0, %v1206
        %v1208 = vpop.f32.mrb[0].mxu0
        %1209 = vmatprep.mubr.bf16.mxu0 0
        %1210 = vmatmul.mubr.bf16.gmra.mrb[0].mxu0 %v792
        %v1211 = vpop.f32.mrb[0].mxu0
        %v1212 = vadd.f32 0.0, %v1211
        %v1213 = vpop.f32.mrb[0].mxu0
        %v1214 = vpop.f32.mrb[0].mxu0
        %v1215 = vadd.f32 0.0, %v1214
        %v1216 = vpop.f32.mrb[0].mxu0
        %1217 = vmatprep.mubr.bf16.mxu0 0
        %1218 = vmatmul.mubr.bf16.gmra.mrb[0].mxu0 %v795
        %v1219 = vpop.f32.mrb[0].mxu0
        %v1220 = vadd.f32 0.0, %v1219
        %v1221 = vpop.f32.mrb[0].mxu0
        %v1222 = vpop.f32.mrb[0].mxu0
        %v1223 = vadd.f32 0.0, %v1222
        %v1224 = vpop.f32.mrb[0].mxu0
        %1225 = vmatprep.mubr.bf16.mxu0 0
        %1226 = vmatmul.mubr.bf16.gmra.mrb[0].mxu0 %v798
        %v1227 = vpop.f32.mrb[0].mxu0
        %v1228 = vadd.f32 0.0, %v1227
        %v1229 = vpop.f32.mrb[0].mxu0
        %v1230 = vpop.f32.mrb[0].mxu0
        %v1231 = vadd.f32 0.0, %v1230
        %v1232 = vpop.f32.mrb[0].mxu0
        %1233 = vmatprep.mubr.bf16.mxu0 0
        %1234 = vmatmul.mubr.bf16.gmra.mrb[0].mxu0 %v801
        %v1235 = vpop.f32.mrb[0].mxu0
        %v1236 = vadd.f32 0.0, %v1235
        %v1237 = vpop.f32.mrb[0].mxu0
        %v1238 = vpop.f32.mrb[0].mxu0
        %v1239 = vadd.f32 0.0, %v1238
        %v1240 = vpop.f32.mrb[0].mxu0
        %1241 = vmatprep.mubr.bf16.mxu0 0
        %1242 = vmatmul.mubr.bf16.gmra.mrb[0].mxu0 %v804
        %v1243 = vpop.f32.mrb[0].mxu0
        %v1244 = vadd.f32 0.0, %v1243
        %v1245 = vpop.f32.mrb[0].mxu0
        %v1246 = vpop.f32.mrb[0].mxu0
        %v1247 = vadd.f32 0.0, %v1246
        %v1248 = vpop.f32.mrb[0].mxu0
        %1249 = vmatprep.mubr.bf16.mxu0 0
        %1250 = vmatmul.mubr.bf16.gmra.mrb[0].mxu0 %v807
        %v1251 = vpop.f32.mrb[0].mxu0
        %v1252 = vadd.f32 0.0, %v1251
        %v1253 = vpop.f32.mrb[0].mxu0
        %v1254 = vpop.f32.mrb[0].mxu0
        %v1255 = vadd.f32 0.0, %v1254
        %v1256 = vpop.f32.mrb[0].mxu0
        %1257 = vmatprep.mubr.bf16.mxu0 0
        %1258 = vmatmul.mubr.bf16.gmra.mrb[0].mxu0 %v810
        %v1259 = vpop.f32.mrb[0].mxu0
        %v1260 = vadd.f32 0.0, %v1259
        %v1261 = vpop.f32.mrb[0].mxu0
        %v1262 = vpop.f32.mrb[0].mxu0
        %v1263 = vadd.f32 0.0, %v1262
        %v1264 = vpop.f32.mrb[0].mxu0
        %1265 = vmatprep.mubr.bf16.mxu0 0
        %1266 = vmatmul.mubr.bf16.gmra.mrb[0].mxu0 %v813
        %v1267 = vpop.f32.mrb[0].mxu0
        %v1268 = vadd.f32 0.0, %v1267
        %v1269 = vpop.f32.mrb[0].mxu0
        %v1270 = vpop.f32.mrb[0].mxu0
        %v1271 = vadd.f32 0.0, %v1270
        %v1272 = vpop.f32.mrb[0].mxu0
        %1273 = vmatprep.mubr.bf16.mxu0 0
        %1274 = vmatmul.mubr.bf16.gmra.mrb[0].mxu0 %v816
        %v1275 = vpop.f32.mrb[0].mxu0
        %v1276 = vadd.f32 0.0, %v1275
        %v1277 = vpop.f32.mrb[0].mxu0
        %v1278 = vpop.f32.mrb[0].mxu0
        %v1279 = vadd.f32 0.0, %v1278
        %v1280 = vpop.f32.mrb[0].mxu0
        %1281 = vmatprep.mubr.bf16.mxu0 0
        %1282 = vmatmul.mubr.bf16.gmra.mrb[0].mxu0 %v819
        %v1283 = vpop.f32.mrb[0].mxu0
        %v1284 = vadd.f32 0.0, %v1283
        %v1285 = vpop.f32.mrb[0].mxu0
        %v1286 = vpop.f32.mrb[0].mxu0
        %v1287 = vadd.f32 0.0, %v1286
        %v1288 = vpop.f32.mrb[0].mxu0
        %1289 = vmatprep.mubr.bf16.mxu0 0
        %1290 = vmatmul.mubr.bf16.gmra.mrb[0].mxu0 %v822
        %v1291 = vpop.f32.mrb[0].mxu0
        %v1292 = vadd.f32 0.0, %v1291
        %v1293 = vpop.f32.mrb[0].mxu0
        %v1294 = vpop.f32.mrb[0].mxu0
        %v1295 = vadd.f32 0.0, %v1294
        %v1296 = vpop.f32.mrb[0].mxu0
        %1297 = vmatprep.mubr.bf16.mxu0 0
        %1298 = vmatmul.mubr.bf16.gmra.mrb[0].mxu0 %v825
        %v1299 = vpop.f32.mrb[0].mxu0
        %v1300 = vadd.f32 0.0, %v1299
        %v1301 = vpop.f32.mrb[0].mxu0
        %v1302 = vpop.f32.mrb[0].mxu0
        %v1303 = vadd.f32 0.0, %v1302
        %v1304 = vpop.f32.mrb[0].mxu0
        %1305 = vmatprep.mubr.bf16.mxu0 0
        %1306 = vmatmul.mubr.bf16.gmra.mrb[0].mxu0 %v828
        %v1307 = vpop.f32.mrb[0].mxu0
        %v1308 = vadd.f32 0.0, %v1307
        %v1309 = vpop.f32.mrb[0].mxu0
        %v1310 = vpop.f32.mrb[0].mxu0
        %v1311 = vadd.f32 0.0, %v1310
        %v1312 = vpop.f32.mrb[0].mxu0
        %1313 = vmatprep.mubr.bf16.mxu0 0
        %1314 = vmatmul.mubr.bf16.gmra.mrb[0].mxu0 %v831
        %v1315 = vpop.f32.mrb[0].mxu0
        %v1316 = vadd.f32 0.0, %v1315
        %v1317 = vpop.f32.mrb[0].mxu0
        %v1318 = vpop.f32.mrb[0].mxu0
        %v1319 = vadd.f32 0.0, %v1318
        %v1320 = vpop.f32.mrb[0].mxu0
        %1321 = vmatprep.mubr.bf16.mxu0 0
        %1322 = vmatmul.mubr.bf16.gmra.mrb[0].mxu0 %v834
        %v1323 = vpop.f32.mrb[0].mxu0
        %v1324 = vadd.f32 0.0, %v1323
        %v1325 = vpop.f32.mrb[0].mxu0
        %v1326 = vpop.f32.mrb[0].mxu0
        %v1327 = vadd.f32 0.0, %v1326
        %v1328 = vpop.f32.mrb[0].mxu0
        %1329 = vmatprep.mubr.bf16.mxu0 0
        %1330 = vmatmul.mubr.bf16.gmra.mrb[0].mxu0 %v837
        %v1331 = vpop.f32.mrb[0].mxu0
        %v1332 = vadd.f32 0.0, %v1331
        %v1333 = vpop.f32.mrb[0].mxu0
        %v1334 = vpop.f32.mrb[0].mxu0
        %v1335 = vadd.f32 0.0, %v1334
        %v1336 = vpop.f32.mrb[0].mxu0
        %1337 = vmatprep.mubr.bf16.mxu0 0
        %1338 = vmatmul.mubr.bf16.gmra.mrb[0].mxu0 %v840
        %v1339 = vpop.f32.mrb[0].mxu0
        %v1340 = vadd.f32 0.0, %v1339
        %v1341 = vpop.f32.mrb[0].mxu0
        %v1342 = vpop.f32.mrb[0].mxu0
        %v1343 = vadd.f32 0.0, %v1342
        %v1344 = vpop.f32.mrb[0].mxu0
        %1345 = vmatprep.mubr.bf16.mxu0 0
        %1346 = vmatmul.mubr.bf16.gmra.mrb[0].mxu0 %v843
        %v1347 = vpop.f32.mrb[0].mxu0
        %v1348 = vadd.f32 0.0, %v1347
        %v1349 = vpop.f32.mrb[0].mxu0
        %v1350 = vpop.f32.mrb[0].mxu0
        %v1351 = vadd.f32 0.0, %v1350
        %v1352 = vpop.f32.mrb[0].mxu0
        %1353 = vmatprep.mubr.bf16.mxu0 0
        %1354 = vmatmul.mubr.bf16.gmra.mrb[0].mxu0 %v846
        %v1355 = vpop.f32.mrb[0].mxu0
        %v1356 = vadd.f32 0.0, %v1355
        %v1357 = vpop.f32.mrb[0].mxu0
        %v1358 = vpop.f32.mrb[0].mxu0
        %v1359 = vadd.f32 0.0, %v1358
        %v1360 = vpop.f32.mrb[0].mxu0
        %1361 = vmatprep.mubr.bf16.mxu0 0
        %1362 = vmatmul.mubr.bf16.gmra.mrb[0].mxu0 %v849
        %v1363 = vpop.f32.mrb[0].mxu0
        %v1364 = vadd.f32 0.0, %v1363
        %v1365 = vpop.f32.mrb[0].mxu0
        %v1366 = vpop.f32.mrb[0].mxu0
        %v1367 = vadd.f32 0.0, %v1366
        %v1368 = vpop.f32.mrb[0].mxu0
        %1369 = vmatprep.mubr.bf16.mxu0 0
        %1370 = vmatmul.mubr.bf16.gmra.mrb[0].mxu0 %v852
        %v1371 = vpop.f32.mrb[0].mxu0
        %v1372 = vadd.f32 0.0, %v1371
        %v1373 = vpop.f32.mrb[0].mxu0
        %v1374 = vpop.f32.mrb[0].mxu0
        %v1375 = vadd.f32 0.0, %v1374
        %v1376 = vpop.f32.mrb[0].mxu0
        %1377 = vmatprep.mubr.bf16.mxu0 0
        %1378 = vmatmul.mubr.bf16.gmra.mrb[0].mxu0 %v855
        %v1379 = vpop.f32.mrb[0].mxu0
        %v1380 = vadd.f32 0.0, %v1379
        %v1381 = vpop.f32.mrb[0].mxu0
        %v1382 = vpop.f32.mrb[0].mxu0
        %v1383 = vadd.f32 0.0, %v1382
        %v1384 = vpop.f32.mrb[0].mxu0
        %1385 = vmatprep.mubr.bf16.mxu0 0
        %1386 = vmatmul.mubr.bf16.gmra.mrb[0].mxu0 %v858
        %v1387 = vpop.f32.mrb[0].mxu0
        %v1388 = vadd.f32 0.0, %v1387
        %v1389 = vpop.f32.mrb[0].mxu0
        %v1390 = vpop.f32.mrb[0].mxu0
        %v1391 = vadd.f32 0.0, %v1390
        %v1392 = vpop.f32.mrb[0].mxu0
        %1393 = vmatprep.mubr.bf16.mxu0 0
        %1394 = vmatmul.mubr.bf16.gmra.mrb[0].mxu0 %v861
        %v1395 = vpop.f32.mrb[0].mxu0
        %v1396 = vadd.f32 0.0, %v1395
        %v1397 = vpop.f32.mrb[0].mxu0
        %v1398 = vpop.f32.mrb[0].mxu0
        %v1399 = vadd.f32 0.0, %v1398
        %v1400 = vpop.f32.mrb[0].mxu0
        %1401 = vmatprep.mubr.bf16.mxu0 0
        %1402 = vmatmul.mubr.bf16.gmra.mrb[0].mxu0 %v864
        %v1403 = vpop.f32.mrb[0].mxu0
        %v1404 = vadd.f32 0.0, %v1403
        %v1405 = vpop.f32.mrb[0].mxu0
        %v1406 = vpop.f32.mrb[0].mxu0
        %v1407 = vadd.f32 0.0, %v1406
        %v1408 = vpop.f32.mrb[0].mxu0
        %1409 = vmatprep.mubr.bf16.mxu0 0
        %1410 = vmatmul.mubr.bf16.gmra.mrb[0].mxu0 %v867
        %v1411 = vpop.f32.mrb[0].mxu0
        %v1412 = vadd.f32 0.0, %v1411
        %v1413 = vpop.f32.mrb[0].mxu0
        %v1414 = vpop.f32.mrb[0].mxu0
        %v1415 = vadd.f32 0.0, %v1414
        %v1416 = vpop.f32.mrb[0].mxu0
        %1417 = vdwg.mxu0
        %v1418 = vmax.f32 %v908, 0.0
        %v1419 = vmax.f32 %v911, 0.0
        %v1420 = vmax.f32 %v916, 0.0
        %v1421 = vmax.f32 %v919, 0.0
        %v1422 = vmax.f32 %v924, 0.0
        %v1423 = vmax.f32 %v927, 0.0
        %v1424 = vmax.f32 %v932, 0.0
        %v1425 = vmax.f32 %v935, 0.0
        %v1426 = vmax.f32 %v940, 0.0
        %v1427 = vmax.f32 %v943, 0.0
        %v1428 = vmax.f32 %v948, 0.0
        %v1429 = vmax.f32 %v951, 0.0
        %v1430 = vmax.f32 %v956, 0.0
        %v1431 = vmax.f32 %v959, 0.0
        %v1432 = vmax.f32 %v964, 0.0
        %v1433 = vmax.f32 %v967, 0.0
        %v1434 = vmax.f32 %v972, 0.0
        %v1435 = vmax.f32 %v975, 0.0
        %v1436 = vmax.f32 %v980, 0.0
        %v1437 = vmax.f32 %v983, 0.0
        %v1438 = vmax.f32 %v988, 0.0
        %v1439 = vmax.f32 %v991, 0.0
        %v1440 = vmax.f32 %v996, 0.0
        %v1441 = vmax.f32 %v999, 0.0
        %v1442 = vmax.f32 %v1004, 0.0
        %v1443 = vmax.f32 %v1007, 0.0
        %v1444 = vmax.f32 %v1012, 0.0
        %v1445 = vmax.f32 %v1015, 0.0
        %v1446 = vmax.f32 %v1020, 0.0
        %v1447 = vmax.f32 %v1023, 0.0
        %v1448 = vmax.f32 %v1028, 0.0
        %v1449 = vmax.f32 %v1031, 0.0
        %v1450 = vmax.f32 %v1036, 0.0
        %v1451 = vmax.f32 %v1039, 0.0
        %v1452 = vmax.f32 %v1044, 0.0
        %v1453 = vmax.f32 %v1047, 0.0
        %v1454 = vmax.f32 %v1052, 0.0
        %v1455 = vmax.f32 %v1055, 0.0
        %v1456 = vmax.f32 %v1060, 0.0
        %v1457 = vmax.f32 %v1063, 0.0
        %v1458 = vmax.f32 %v1068, 0.0
        %v1459 = vmax.f32 %v1071, 0.0
        %v1460 = vmax.f32 %v1076, 0.0
        %v1461 = vmax.f32 %v1079, 0.0
        %v1462 = vmax.f32 %v1084, 0.0
        %v1463 = vmax.f32 %v1087, 0.0
        %v1464 = vmax.f32 %v1092, 0.0
        %v1465 = vmax.f32 %v1095, 0.0
        %v1466 = vmax.f32 %v1100, 0.0
        %v1467 = vmax.f32 %v1103, 0.0
        %v1468 = vmax.f32 %v1108, 0.0
        %v1469 = vmax.f32 %v1111, 0.0
        %v1470 = vmax.f32 %v1116, 0.0
        %v1471 = vmax.f32 %v1119, 0.0
        %v1472 = vmax.f32 %v1124, 0.0
        %v1473 = vmax.f32 %v1127, 0.0
        %v1474 = vmax.f32 %v1132, 0.0
        %v1475 = vmax.f32 %v1135, 0.0
        %v1476 = vmax.f32 %v1140, 0.0
        %v1477 = vmax.f32 %v1143, 0.0
        %v1478 = vmax.f32 %v1148, 0.0
        %v1479 = vmax.f32 %v1151, 0.0
        %v1480 = vmax.f32 %v1156, 0.0
        %v1481 = vmax.f32 %v1159, 0.0
        %v1482 = vmax.f32 %v1164, 0.0
        %v1483 = vmax.f32 %v1167, 0.0
        %v1484 = vmax.f32 %v1172, 0.0
        %v1485 = vmax.f32 %v1175, 0.0
        %v1486 = vmax.f32 %v1180, 0.0
        %v1487 = vmax.f32 %v1183, 0.0
        %v1488 = vmax.f32 %v1188, 0.0
        %v1489 = vmax.f32 %v1191, 0.0
        %v1490 = vmax.f32 %v1196, 0.0
        %v1491 = vmax.f32 %v1199, 0.0
        %v1492 = vmax.f32 %v1204, 0.0
        %v1493 = vmax.f32 %v1207, 0.0
        %v1494 = vmax.f32 %v1212, 0.0
        %v1495 = vmax.f32 %v1215, 0.0
        %v1496 = vmax.f32 %v1220, 0.0
        %v1497 = vmax.f32 %v1223, 0.0
        %v1498 = vmax.f32 %v1228, 0.0
        %v1499 = vmax.f32 %v1231, 0.0
        %v1500 = vmax.f32 %v1236, 0.0
        %v1501 = vmax.f32 %v1239, 0.0
        %v1502 = vmax.f32 %v1244, 0.0
        %v1503 = vmax.f32 %v1247, 0.0
        %v1504 = vmax.f32 %v1252, 0.0
        %v1505 = vmax.f32 %v1255, 0.0
        %v1506 = vmax.f32 %v1260, 0.0
        %v1507 = vmax.f32 %v1263, 0.0
        %v1508 = vmax.f32 %v1268, 0.0
        %v1509 = vmax.f32 %v1271, 0.0
        %v1510 = vmax.f32 %v1276, 0.0
        %v1511 = vmax.f32 %v1279, 0.0
        %v1512 = vmax.f32 %v1284, 0.0
        %v1513 = vmax.f32 %v1287, 0.0
        %v1514 = vmax.f32 %v1292, 0.0
        %v1515 = vmax.f32 %v1295, 0.0
        %v1516 = vmax.f32 %v1300, 0.0
        %v1517 = vmax.f32 %v1303, 0.0
        %v1518 = vmax.f32 %v1308, 0.0
        %v1519 = vmax.f32 %v1311, 0.0
        %v1520 = vmax.f32 %v1316, 0.0
        %v1521 = vmax.f32 %v1319, 0.0
        %v1522 = vmax.f32 %v1324, 0.0
        %v1523 = vmax.f32 %v1327, 0.0
        %v1524 = vmax.f32 %v1332, 0.0
        %v1525 = vmax.f32 %v1335, 0.0
        %v1526 = vmax.f32 %v1340, 0.0
        %v1527 = vmax.f32 %v1343, 0.0
        %v1528 = vmax.f32 %v1348, 0.0
        %v1529 = vmax.f32 %v1351, 0.0
        %v1530 = vmax.f32 %v1356, 0.0
        %v1531 = vmax.f32 %v1359, 0.0
        %v1532 = vmax.f32 %v1364, 0.0
        %v1533 = vmax.f32 %v1367, 0.0
        %v1534 = vmax.f32 %v1372, 0.0
        %v1535 = vmax.f32 %v1375, 0.0
        %v1536 = vmax.f32 %v1380, 0.0
        %v1537 = vmax.f32 %v1383, 0.0
        %v1538 = vmax.f32 %v1388, 0.0
        %v1539 = vmax.f32 %v1391, 0.0
        %v1540 = vmax.f32 %v1396, 0.0
        %v1541 = vmax.f32 %v1399, 0.0
        %v1542 = vmax.f32 %v1404, 0.0
        %v1543 = vmax.f32 %v1407, 0.0
        %v1544 = vmax.f32 %v1412, 0.0
        %v1545 = vmax.f32 %v1415, 0.0
        %v1546 = vld [vmem:[%s2] sm:$0xff]
        %v1547 = vld [vmem:[%s2 + $0x8] sm:$0xff]
        %v1548 = vld [vmem:[%s2 + $0x10] sm:$0xff]
        %v1549 = vld [vmem:[%s2 + $0x18] sm:$0xff]
        %v1550 = vld [vmem:[%s2 + $0x20] sm:$0xff]
        %v1551 = vld [vmem:[%s2 + $0x28] sm:$0xff]
        %v1552 = vld [vmem:[%s2 + $0x30] sm:$0xff]
        %v1553 = vld [vmem:[%s2 + $0x38] sm:$0xff]
        %v1554 = vld [vmem:[%s2 + $0x40] sm:$0xff]
        %v1555 = vld [vmem:[%s2 + $0x48] sm:$0xff]
        %v1556 = vld [vmem:[%s2 + $0x50] sm:$0xff]
        %v1557 = vld [vmem:[%s2 + $0x58] sm:$0xff]
        %v1558 = vld [vmem:[%s2 + $0x60] sm:$0xff]
        %v1559 = vld [vmem:[%s2 + $0x68] sm:$0xff]
        %v1560 = vld [vmem:[%s2 + $0x70] sm:$0xff]
        %v1561 = vld [vmem:[%s2 + $0x78] sm:$0xff]
        %v1562 = vmul.f32 %v1418, %v1546
        %v1563 = vmul.f32 %v1419, %v1547
        %v1564 = vmul.f32 %v1420, %v1548
        %v1565 = vmul.f32 %v1421, %v1549
        %v1566 = vmul.f32 %v1422, %v1550
        %v1567 = vmul.f32 %v1423, %v1551
        %v1568 = vmul.f32 %v1424, %v1552
        %v1569 = vmul.f32 %v1425, %v1553
        %v1570 = vmul.f32 %v1426, %v1554
        %v1571 = vmul.f32 %v1427, %v1555
        %v1572 = vmul.f32 %v1428, %v1556
        %v1573 = vmul.f32 %v1429, %v1557
        %v1574 = vmul.f32 %v1430, %v1558
        %v1575 = vmul.f32 %v1431, %v1559
        %v1576 = vmul.f32 %v1432, %v1560
        %v1577 = vmul.f32 %v1433, %v1561
        %v1578 = vmul.f32 %v1434, %v1546
        %v1579 = vmul.f32 %v1435, %v1547
        %v1580 = vmul.f32 %v1436, %v1548
        %v1581 = vmul.f32 %v1437, %v1549
        %v1582 = vmul.f32 %v1438, %v1550
        %v1583 = vmul.f32 %v1439, %v1551
        %v1584 = vmul.f32 %v1440, %v1552
        %v1585 = vmul.f32 %v1441, %v1553
        %v1586 = vmul.f32 %v1442, %v1554
        %v1587 = vmul.f32 %v1443, %v1555
        %v1588 = vmul.f32 %v1444, %v1556
        %v1589 = vmul.f32 %v1445, %v1557
        %v1590 = vmul.f32 %v1446, %v1558
        %v1591 = vmul.f32 %v1447, %v1559
        %v1592 = vmul.f32 %v1448, %v1560
        %v1593 = vmul.f32 %v1449, %v1561
        %v1594 = vmul.f32 %v1450, %v1546
        %v1595 = vmul.f32 %v1451, %v1547
        %v1596 = vmul.f32 %v1452, %v1548
        %v1597 = vmul.f32 %v1453, %v1549
        %v1598 = vmul.f32 %v1454, %v1550
        %v1599 = vmul.f32 %v1455, %v1551
        %v1600 = vmul.f32 %v1456, %v1552
        %v1601 = vmul.f32 %v1457, %v1553
        %v1602 = vmul.f32 %v1458, %v1554
        %v1603 = vmul.f32 %v1459, %v1555
        %v1604 = vmul.f32 %v1460, %v1556
        %v1605 = vmul.f32 %v1461, %v1557
        %v1606 = vmul.f32 %v1462, %v1558
        %v1607 = vmul.f32 %v1463, %v1559
        %v1608 = vmul.f32 %v1464, %v1560
        %v1609 = vmul.f32 %v1465, %v1561
        %v1610 = vmul.f32 %v1466, %v1546
        %v1611 = vmul.f32 %v1467, %v1547
        %v1612 = vmul.f32 %v1468, %v1548
        %v1613 = vmul.f32 %v1469, %v1549
        %v1614 = vmul.f32 %v1470, %v1550
        %v1615 = vmul.f32 %v1471, %v1551
        %v1616 = vmul.f32 %v1472, %v1552
        %v1617 = vmul.f32 %v1473, %v1553
        %v1618 = vmul.f32 %v1474, %v1554
        %v1619 = vmul.f32 %v1475, %v1555
        %v1620 = vmul.f32 %v1476, %v1556
        %v1621 = vmul.f32 %v1477, %v1557
        %v1622 = vmul.f32 %v1478, %v1558
        %v1623 = vmul.f32 %v1479, %v1559
        %v1624 = vmul.f32 %v1480, %v1560
        %v1625 = vmul.f32 %v1481, %v1561
        %v1626 = vmul.f32 %v1482, %v1546
        %v1627 = vmul.f32 %v1483, %v1547
        %v1628 = vmul.f32 %v1484, %v1548
        %v1629 = vmul.f32 %v1485, %v1549
        %v1630 = vmul.f32 %v1486, %v1550
        %v1631 = vmul.f32 %v1487, %v1551
        %v1632 = vmul.f32 %v1488, %v1552
        %v1633 = vmul.f32 %v1489, %v1553
        %v1634 = vmul.f32 %v1490, %v1554
        %v1635 = vmul.f32 %v1491, %v1555
        %v1636 = vmul.f32 %v1492, %v1556
        %v1637 = vmul.f32 %v1493, %v1557
        %v1638 = vmul.f32 %v1494, %v1558
        %v1639 = vmul.f32 %v1495, %v1559
        %v1640 = vmul.f32 %v1496, %v1560
        %v1641 = vmul.f32 %v1497, %v1561
        %v1642 = vmul.f32 %v1498, %v1546
        %v1643 = vmul.f32 %v1499, %v1547
        %v1644 = vmul.f32 %v1500, %v1548
        %v1645 = vmul.f32 %v1501, %v1549
        %v1646 = vmul.f32 %v1502, %v1550
        %v1647 = vmul.f32 %v1503, %v1551
        %v1648 = vmul.f32 %v1504, %v1552
        %v1649 = vmul.f32 %v1505, %v1553
        %v1650 = vmul.f32 %v1506, %v1554
        %v1651 = vmul.f32 %v1507, %v1555
        %v1652 = vmul.f32 %v1508, %v1556
        %v1653 = vmul.f32 %v1509, %v1557
        %v1654 = vmul.f32 %v1510, %v1558
        %v1655 = vmul.f32 %v1511, %v1559
        %v1656 = vmul.f32 %v1512, %v1560
        %v1657 = vmul.f32 %v1513, %v1561
        %v1658 = vmul.f32 %v1514, %v1546
        %v1659 = vmul.f32 %v1515, %v1547
        %v1660 = vmul.f32 %v1516, %v1548
        %v1661 = vmul.f32 %v1517, %v1549
        %v1662 = vmul.f32 %v1518, %v1550
        %v1663 = vmul.f32 %v1519, %v1551
        %v1664 = vmul.f32 %v1520, %v1552
        %v1665 = vmul.f32 %v1521, %v1553
        %v1666 = vmul.f32 %v1522, %v1554
        %v1667 = vmul.f32 %v1523, %v1555
        %v1668 = vmul.f32 %v1524, %v1556
        %v1669 = vmul.f32 %v1525, %v1557
        %v1670 = vmul.f32 %v1526, %v1558
        %v1671 = vmul.f32 %v1527, %v1559
        %v1672 = vmul.f32 %v1528, %v1560
        %v1673 = vmul.f32 %v1529, %v1561
        %v1674 = vmul.f32 %v1530, %v1546
        %v1675 = vmul.f32 %v1531, %v1547
        %v1676 = vmul.f32 %v1532, %v1548
        %v1677 = vmul.f32 %v1533, %v1549
        %v1678 = vmul.f32 %v1534, %v1550
        %v1679 = vmul.f32 %v1535, %v1551
        %v1680 = vmul.f32 %v1536, %v1552
        %v1681 = vmul.f32 %v1537, %v1553
        %v1682 = vmul.f32 %v1538, %v1554
        %v1683 = vmul.f32 %v1539, %v1555
        %v1684 = vmul.f32 %v1540, %v1556
        %v1685 = vmul.f32 %v1541, %v1557
        %v1686 = vmul.f32 %v1542, %v1558
        %v1687 = vmul.f32 %v1543, %v1559
        %v1688 = vmul.f32 %v1544, %v1560
        %v1689 = vmul.f32 %v1545, %v1561
        %vm1690 = vcmask 130048
        %v1691 = vsel %vm1690, %v1562, 0.0
        %v1692 = vsel %vm1690, %v1563, 0.0
        %v1693 = vadd.f32 %v1691, %v1692
        %v1694 = vsel %vm1690, %v1564, 0.0
        %v1695 = vadd.f32 %v1693, %v1694
        %v1696 = vsel %vm1690, %v1565, 0.0
        %v1697 = vadd.f32 %v1695, %v1696
        %v1698 = vsel %vm1690, %v1566, 0.0
        %v1699 = vadd.f32 %v1697, %v1698
        %v1700 = vsel %vm1690, %v1567, 0.0
        %v1701 = vadd.f32 %v1699, %v1700
        %v1702 = vsel %vm1690, %v1568, 0.0
        %v1703 = vadd.f32 %v1701, %v1702
        %v1704 = vsel %vm1690, %v1569, 0.0
        %v1705 = vadd.f32 %v1703, %v1704
        %v1706 = vsel %vm1690, %v1570, 0.0
        %v1707 = vadd.f32 %v1705, %v1706
        %v1708 = vsel %vm1690, %v1571, 0.0
        %v1709 = vadd.f32 %v1707, %v1708
        %v1710 = vsel %vm1690, %v1572, 0.0
        %v1711 = vadd.f32 %v1709, %v1710
        %v1712 = vsel %vm1690, %v1573, 0.0
        %v1713 = vadd.f32 %v1711, %v1712
        %v1714 = vsel %vm1690, %v1574, 0.0
        %v1715 = vadd.f32 %v1713, %v1714
        %v1716 = vsel %vm1690, %v1575, 0.0
        %v1717 = vadd.f32 %v1715, %v1716
        %v1718 = vsel %vm1690, %v1576, 0.0
        %v1719 = vadd.f32 %v1717, %v1718
        %v1720 = vsel %vm1690, %v1577, 0.0
        %v1721 = vadd.f32 %v1719, %v1720
        %v1722 = vrot.slane %v1721, 4
        %v1723 = vadd.f32 %v1721, %v1722
        %v1724 = vrot.slane %v1723, 2
        %v1725 = vadd.f32 %v1723, %v1724
        %v1726 = vrot.slane %v1725, 1
        %v1727 = vadd.f32 %v1725, %v1726
        %v1728 = vsel %vm1690, %v1578, 0.0
        %v1729 = vsel %vm1690, %v1579, 0.0
        %v1730 = vadd.f32 %v1728, %v1729
        %v1731 = vsel %vm1690, %v1580, 0.0
        %v1732 = vadd.f32 %v1730, %v1731
        %v1733 = vsel %vm1690, %v1581, 0.0
        %v1734 = vadd.f32 %v1732, %v1733
        %v1735 = vsel %vm1690, %v1582, 0.0
        %v1736 = vadd.f32 %v1734, %v1735
        %v1737 = vsel %vm1690, %v1583, 0.0
        %v1738 = vadd.f32 %v1736, %v1737
        %v1739 = vsel %vm1690, %v1584, 0.0
        %v1740 = vadd.f32 %v1738, %v1739
        %v1741 = vsel %vm1690, %v1585, 0.0
        %v1742 = vadd.f32 %v1740, %v1741
        %v1743 = vsel %vm1690, %v1586, 0.0
        %v1744 = vadd.f32 %v1742, %v1743
        %v1745 = vsel %vm1690, %v1587, 0.0
        %v1746 = vadd.f32 %v1744, %v1745
        %v1747 = vsel %vm1690, %v1588, 0.0
        %v1748 = vadd.f32 %v1746, %v1747
        %v1749 = vsel %vm1690, %v1589, 0.0
        %v1750 = vadd.f32 %v1748, %v1749
        %v1751 = vsel %vm1690, %v1590, 0.0
        %v1752 = vadd.f32 %v1750, %v1751
        %v1753 = vsel %vm1690, %v1591, 0.0
        %v1754 = vadd.f32 %v1752, %v1753
        %v1755 = vsel %vm1690, %v1592, 0.0
        %v1756 = vadd.f32 %v1754, %v1755
        %v1757 = vsel %vm1690, %v1593, 0.0
        %v1758 = vadd.f32 %v1756, %v1757
        %v1759 = vrot.slane %v1758, 4
        %v1760 = vadd.f32 %v1758, %v1759
        %v1761 = vrot.slane %v1760, 2
        %v1762 = vadd.f32 %v1760, %v1761
        %v1763 = vrot.slane %v1762, 1
        %v1764 = vadd.f32 %v1762, %v1763
        %v1765 = vsel %vm1690, %v1594, 0.0
        %v1766 = vsel %vm1690, %v1595, 0.0
        %v1767 = vadd.f32 %v1765, %v1766
        %v1768 = vsel %vm1690, %v1596, 0.0
        %v1769 = vadd.f32 %v1767, %v1768
        %v1770 = vsel %vm1690, %v1597, 0.0
        %v1771 = vadd.f32 %v1769, %v1770
        %v1772 = vsel %vm1690, %v1598, 0.0
        %v1773 = vadd.f32 %v1771, %v1772
        %v1774 = vsel %vm1690, %v1599, 0.0
        %v1775 = vadd.f32 %v1773, %v1774
        %v1776 = vsel %vm1690, %v1600, 0.0
        %v1777 = vadd.f32 %v1775, %v1776
        %v1778 = vsel %vm1690, %v1601, 0.0
        %v1779 = vadd.f32 %v1777, %v1778
        %v1780 = vsel %vm1690, %v1602, 0.0
        %v1781 = vadd.f32 %v1779, %v1780
        %v1782 = vsel %vm1690, %v1603, 0.0
        %v1783 = vadd.f32 %v1781, %v1782
        %v1784 = vsel %vm1690, %v1604, 0.0
        %v1785 = vadd.f32 %v1783, %v1784
        %v1786 = vsel %vm1690, %v1605, 0.0
        %v1787 = vadd.f32 %v1785, %v1786
        %v1788 = vsel %vm1690, %v1606, 0.0
        %v1789 = vadd.f32 %v1787, %v1788
        %v1790 = vsel %vm1690, %v1607, 0.0
        %v1791 = vadd.f32 %v1789, %v1790
        %v1792 = vsel %vm1690, %v1608, 0.0
        %v1793 = vadd.f32 %v1791, %v1792
        %v1794 = vsel %vm1690, %v1609, 0.0
        %v1795 = vadd.f32 %v1793, %v1794
        %v1796 = vrot.slane %v1795, 4
        %v1797 = vadd.f32 %v1795, %v1796
        %v1798 = vrot.slane %v1797, 2
        %v1799 = vadd.f32 %v1797, %v1798
        %v1800 = vrot.slane %v1799, 1
        %v1801 = vadd.f32 %v1799, %v1800
        %v1802 = vsel %vm1690, %v1610, 0.0
        %v1803 = vsel %vm1690, %v1611, 0.0
        %v1804 = vadd.f32 %v1802, %v1803
        %v1805 = vsel %vm1690, %v1612, 0.0
        %v1806 = vadd.f32 %v1804, %v1805
        %v1807 = vsel %vm1690, %v1613, 0.0
        %v1808 = vadd.f32 %v1806, %v1807
        %v1809 = vsel %vm1690, %v1614, 0.0
        %v1810 = vadd.f32 %v1808, %v1809
        %v1811 = vsel %vm1690, %v1615, 0.0
        %v1812 = vadd.f32 %v1810, %v1811
        %v1813 = vsel %vm1690, %v1616, 0.0
        %v1814 = vadd.f32 %v1812, %v1813
        %v1815 = vsel %vm1690, %v1617, 0.0
        %v1816 = vadd.f32 %v1814, %v1815
        %v1817 = vsel %vm1690, %v1618, 0.0
        %v1818 = vadd.f32 %v1816, %v1817
        %v1819 = vsel %vm1690, %v1619, 0.0
        %v1820 = vadd.f32 %v1818, %v1819
        %v1821 = vsel %vm1690, %v1620, 0.0
        %v1822 = vadd.f32 %v1820, %v1821
        %v1823 = vsel %vm1690, %v1621, 0.0
        %v1824 = vadd.f32 %v1822, %v1823
        %v1825 = vsel %vm1690, %v1622, 0.0
        %v1826 = vadd.f32 %v1824, %v1825
        %v1827 = vsel %vm1690, %v1623, 0.0
        %v1828 = vadd.f32 %v1826, %v1827
        %v1829 = vsel %vm1690, %v1624, 0.0
        %v1830 = vadd.f32 %v1828, %v1829
        %v1831 = vsel %vm1690, %v1625, 0.0
        %v1832 = vadd.f32 %v1830, %v1831
        %v1833 = vrot.slane %v1832, 4
        %v1834 = vadd.f32 %v1832, %v1833
        %v1835 = vrot.slane %v1834, 2
        %v1836 = vadd.f32 %v1834, %v1835
        %v1837 = vrot.slane %v1836, 1
        %v1838 = vadd.f32 %v1836, %v1837
        %v1839 = vsel %vm1690, %v1626, 0.0
        %v1840 = vsel %vm1690, %v1627, 0.0
        %v1841 = vadd.f32 %v1839, %v1840
        %v1842 = vsel %vm1690, %v1628, 0.0
        %v1843 = vadd.f32 %v1841, %v1842
        %v1844 = vsel %vm1690, %v1629, 0.0
        %v1845 = vadd.f32 %v1843, %v1844
        %v1846 = vsel %vm1690, %v1630, 0.0
        %v1847 = vadd.f32 %v1845, %v1846
        %v1848 = vsel %vm1690, %v1631, 0.0
        %v1849 = vadd.f32 %v1847, %v1848
        %v1850 = vsel %vm1690, %v1632, 0.0
        %v1851 = vadd.f32 %v1849, %v1850
        %v1852 = vsel %vm1690, %v1633, 0.0
        %v1853 = vadd.f32 %v1851, %v1852
        %v1854 = vsel %vm1690, %v1634, 0.0
        %v1855 = vadd.f32 %v1853, %v1854
        %v1856 = vsel %vm1690, %v1635, 0.0
        %v1857 = vadd.f32 %v1855, %v1856
        %v1858 = vsel %vm1690, %v1636, 0.0
        %v1859 = vadd.f32 %v1857, %v1858
        %v1860 = vsel %vm1690, %v1637, 0.0
        %v1861 = vadd.f32 %v1859, %v1860
        %v1862 = vsel %vm1690, %v1638, 0.0
        %v1863 = vadd.f32 %v1861, %v1862
        %v1864 = vsel %vm1690, %v1639, 0.0
        %v1865 = vadd.f32 %v1863, %v1864
        %v1866 = vsel %vm1690, %v1640, 0.0
        %v1867 = vadd.f32 %v1865, %v1866
        %v1868 = vsel %vm1690, %v1641, 0.0
        %v1869 = vadd.f32 %v1867, %v1868
        %v1870 = vrot.slane %v1869, 4
        %v1871 = vadd.f32 %v1869, %v1870
        %v1872 = vrot.slane %v1871, 2
        %v1873 = vadd.f32 %v1871, %v1872
        %v1874 = vrot.slane %v1873, 1
        %v1875 = vadd.f32 %v1873, %v1874
        %v1876 = vsel %vm1690, %v1642, 0.0
        %v1877 = vsel %vm1690, %v1643, 0.0
        %v1878 = vadd.f32 %v1876, %v1877
        %v1879 = vsel %vm1690, %v1644, 0.0
        %v1880 = vadd.f32 %v1878, %v1879
        %v1881 = vsel %vm1690, %v1645, 0.0
        %v1882 = vadd.f32 %v1880, %v1881
        %v1883 = vsel %vm1690, %v1646, 0.0
        %v1884 = vadd.f32 %v1882, %v1883
        %v1885 = vsel %vm1690, %v1647, 0.0
        %v1886 = vadd.f32 %v1884, %v1885
        %v1887 = vsel %vm1690, %v1648, 0.0
        %v1888 = vadd.f32 %v1886, %v1887
        %v1889 = vsel %vm1690, %v1649, 0.0
        %v1890 = vadd.f32 %v1888, %v1889
        %v1891 = vsel %vm1690, %v1650, 0.0
        %v1892 = vadd.f32 %v1890, %v1891
        %v1893 = vsel %vm1690, %v1651, 0.0
        %v1894 = vadd.f32 %v1892, %v1893
        %v1895 = vsel %vm1690, %v1652, 0.0
        %v1896 = vadd.f32 %v1894, %v1895
        %v1897 = vsel %vm1690, %v1653, 0.0
        %v1898 = vadd.f32 %v1896, %v1897
        %v1899 = vsel %vm1690, %v1654, 0.0
        %v1900 = vadd.f32 %v1898, %v1899
        %v1901 = vsel %vm1690, %v1655, 0.0
        %v1902 = vadd.f32 %v1900, %v1901
        %v1903 = vsel %vm1690, %v1656, 0.0
        %v1904 = vadd.f32 %v1902, %v1903
        %v1905 = vsel %vm1690, %v1657, 0.0
        %v1906 = vadd.f32 %v1904, %v1905
        %v1907 = vrot.slane %v1906, 4
        %v1908 = vadd.f32 %v1906, %v1907
        %v1909 = vrot.slane %v1908, 2
        %v1910 = vadd.f32 %v1908, %v1909
        %v1911 = vrot.slane %v1910, 1
        %v1912 = vadd.f32 %v1910, %v1911
        %v1913 = vsel %vm1690, %v1658, 0.0
        %v1914 = vsel %vm1690, %v1659, 0.0
        %v1915 = vadd.f32 %v1913, %v1914
        %v1916 = vsel %vm1690, %v1660, 0.0
        %v1917 = vadd.f32 %v1915, %v1916
        %v1918 = vsel %vm1690, %v1661, 0.0
        %v1919 = vadd.f32 %v1917, %v1918
        %v1920 = vsel %vm1690, %v1662, 0.0
        %v1921 = vadd.f32 %v1919, %v1920
        %v1922 = vsel %vm1690, %v1663, 0.0
        %v1923 = vadd.f32 %v1921, %v1922
        %v1924 = vsel %vm1690, %v1664, 0.0
        %v1925 = vadd.f32 %v1923, %v1924
        %v1926 = vsel %vm1690, %v1665, 0.0
        %v1927 = vadd.f32 %v1925, %v1926
        %v1928 = vsel %vm1690, %v1666, 0.0
        %v1929 = vadd.f32 %v1927, %v1928
        %v1930 = vsel %vm1690, %v1667, 0.0
        %v1931 = vadd.f32 %v1929, %v1930
        %v1932 = vsel %vm1690, %v1668, 0.0
        %v1933 = vadd.f32 %v1931, %v1932
        %v1934 = vsel %vm1690, %v1669, 0.0
        %v1935 = vadd.f32 %v1933, %v1934
        %v1936 = vsel %vm1690, %v1670, 0.0
        %v1937 = vadd.f32 %v1935, %v1936
        %v1938 = vsel %vm1690, %v1671, 0.0
        %v1939 = vadd.f32 %v1937, %v1938
        %v1940 = vsel %vm1690, %v1672, 0.0
        %v1941 = vadd.f32 %v1939, %v1940
        %v1942 = vsel %vm1690, %v1673, 0.0
        %v1943 = vadd.f32 %v1941, %v1942
        %v1944 = vrot.slane %v1943, 4
        %v1945 = vadd.f32 %v1943, %v1944
        %v1946 = vrot.slane %v1945, 2
        %v1947 = vadd.f32 %v1945, %v1946
        %v1948 = vrot.slane %v1947, 1
        %v1949 = vadd.f32 %v1947, %v1948
        %v1950 = vsel %vm1690, %v1674, 0.0
        %v1951 = vsel %vm1690, %v1675, 0.0
        %v1952 = vadd.f32 %v1950, %v1951
        %v1953 = vsel %vm1690, %v1676, 0.0
        %v1954 = vadd.f32 %v1952, %v1953
        %v1955 = vsel %vm1690, %v1677, 0.0
        %v1956 = vadd.f32 %v1954, %v1955
        %v1957 = vsel %vm1690, %v1678, 0.0
        %v1958 = vadd.f32 %v1956, %v1957
        %v1959 = vsel %vm1690, %v1679, 0.0
        %v1960 = vadd.f32 %v1958, %v1959
        %v1961 = vsel %vm1690, %v1680, 0.0
        %v1962 = vadd.f32 %v1960, %v1961
        %v1963 = vsel %vm1690, %v1681, 0.0
        %v1964 = vadd.f32 %v1962, %v1963
        %v1965 = vsel %vm1690, %v1682, 0.0
        %v1966 = vadd.f32 %v1964, %v1965
        %v1967 = vsel %vm1690, %v1683, 0.0
        %v1968 = vadd.f32 %v1966, %v1967
        %v1969 = vsel %vm1690, %v1684, 0.0
        %v1970 = vadd.f32 %v1968, %v1969
        %v1971 = vsel %vm1690, %v1685, 0.0
        %v1972 = vadd.f32 %v1970, %v1971
        %v1973 = vsel %vm1690, %v1686, 0.0
        %v1974 = vadd.f32 %v1972, %v1973
        %v1975 = vsel %vm1690, %v1687, 0.0
        %v1976 = vadd.f32 %v1974, %v1975
        %v1977 = vsel %vm1690, %v1688, 0.0
        %v1978 = vadd.f32 %v1976, %v1977
        %v1979 = vsel %vm1690, %v1689, 0.0
        %v1980 = vadd.f32 %v1978, %v1979
        %v1981 = vrot.slane %v1980, 4
        %v1982 = vadd.f32 %v1980, %v1981
        %v1983 = vrot.slane %v1982, 2
        %v1984 = vadd.f32 %v1982, %v1983
        %v1985 = vrot.slane %v1984, 1
        %v1986 = vadd.f32 %v1984, %v1985
        %v1987 = vld [vmem:[%s3] sm:$0x1]
        %v1989 = vlaneseq
        %v1990 = vshrl.u32 %v1989, 7
        %v1991 = vsub.s32 0, %v1990
        %v1992 = vrot.slane %v1987, %v1991
        %v1994 = vadd.f32 %v1727, %v1992
        %v1995 = vadd.f32 %v1764, %v1992
        %v1996 = vadd.f32 %v1801, %v1992
        %v1997 = vadd.f32 %v1838, %v1992
        %v1998 = vadd.f32 %v1875, %v1992
        %v1999 = vadd.f32 %v1912, %v1992
        %v2000 = vadd.f32 %v1949, %v1992
        %v2001 = vadd.f32 %v1986, %v1992
        %v2010 = vrot.slane %v1995, 7
        %vm2011 = vcmask 1041409
        %v2012 = vsel %vm2011, %v2010, %v1994
        %v2013 = vrot.slane %v1996, 6
        %vm2014 = vcmask 1042434
        %v2015 = vsel %vm2014, %v2013, %v2012
        %v2016 = vrot.slane %v1997, 5
        %vm2017 = vcmask 1043459
        %v2018 = vsel %vm2017, %v2016, %v2015
        %v2019 = vrot.slane %v1998, 4
        %vm2020 = vcmask 1044484
        %v2021 = vsel %vm2020, %v2019, %v2018
        %v2022 = vrot.slane %v1999, 3
        %vm2023 = vcmask 1045509
        %v2024 = vsel %vm2023, %v2022, %v2021
        %v2025 = vrot.slane %v2000, 2
        %vm2026 = vcmask 1046534
        %v2027 = vsel %vm2026, %v2025, %v2024
        %v2028 = vrot.slane %v2001, 1
        %vm2029 = vcmask 1047559
        %v2030 = vsel %vm2029, %v2028, %v2027
        %2032 = vst.msk [vmem:[%s215] sm:$0xff] %vm1690, %v2030
        %s2033 = sand.u32 %s131, 1
        %s2034 = scalar_lea.sflag [#allocation3], %s2033
        %s2035 = sand.u32 %s131, 1
        %s2036 = smul.addr %s2035, 8
        %s2037 = scalar_lea.vmem [#allocation2], %s2036
        // Predicated region
        $region37: #{tpu_custom_call.1} parent=35 // pred_check
          %p2038 = pneg %p141
        $region38: #{tpu_custom_call.1} parent=35 // pred_check_branch
          %2040 = sbr.rel (%p2038) target = $region40
        $region39: #{tpu_custom_call.1} parent=35 // pred_region
          %s2042 = ssub.s32 128, 128
          %2043 = vsyncadd %s2034, %s2042
          %s2044 = smul.addr %s22, 2
          %s2045 = sadd.s32 %s23, %s2044
          %s2046 = smul.addr %s2045, 128
          %s2047 = scalar_lea.hbm %s4, %s2046
          %s2049 = sshll.u32 %s2037, 4
          %s2050 = int_to_ptr.vmem [resolvable:$true] %s2049
          %2052 = dma.vmem_to_hbm [thread:$0]  %s2050, 128, %s2047, %s2034
        $region40: #{tpu_custom_call.1} parent=35 // pred_fallthru
          _
      $region36: #{tpu_custom_call.1} parent=5 // pred_fallthru
        _
      %p2053 = scmp.le.s32.totalorder 2, %s13
      // Predicated region
      $region41: #{tpu_custom_call.1} parent=5 // pred_check
        %p2054 = pneg %p2053
      $region42: #{tpu_custom_call.1} parent=5 // pred_check_branch
        %2056 = sbr.rel (%p2054) target = $region44
      $region43: #{tpu_custom_call.1} parent=5 // pred_region
        %s2057 = ssub.s32 %s13, 2
        // Predicated region
        $region45: #{tpu_custom_call.1} parent=43 // pred_check
          %p2058 = pneg %p147
        $region46: #{tpu_custom_call.1} parent=43 // pred_check_branch
          %2060 = sbr.rel (%p2058) target = $region48
        $region47: #{tpu_custom_call.1} parent=43 // pred_region
          %s2061 = sand.u32 %s132, 1
          %s2062 = scalar_lea.sflag [#allocation3], %s2061
          %s2063 = sand.u32 %s132, 1
          %s2064 = smul.addr %s2063, 8
          %s2065 = scalar_lea.vmem [#allocation2], %s2064
          %2066 = dma.done %s2062, 128
        $region48: #{tpu_custom_call.1} parent=43 // pred_fallthru
          _
      $region44: #{tpu_custom_call.1} parent=5 // pred_fallthru
        _
    $region6: #{tpu_custom_call.1} parent=1 // loop_footer
      %s17 = sadd.s32 1, %s13
    $region7: #{tpu_custom_call.1} parent=1 // loop_footer_branch
      %12 = sbr.rel target = $region3
    $region8: #{tpu_custom_call.1} parent=1 // loop_exit
      _
    %2067 = vsyncpa [#allocation3], 1
    %s2068 = scalar_lea.sflag [#allocation3], 1
    %2069 = vsyncpa %s2068, 1

</llo_original>
